<compile_context>
chip_gen: v6e
topology: v6e:2x2x1
jax: 0.10.0
libtpu: 0.0.40
codegen_flags: <defaults>
</compile_context>

<pallas_src>
import functools
import math

import numpy as np

import jax
import jax.numpy as jnp
from jax import lax
from jax.experimental import pallas as pl
from jax.experimental.pallas import tpu as pltpu


def _layernorm(x, gamma, beta, eps=1e-5):
    mu = jnp.mean(x, axis=-1, keepdims=True)
    var = jnp.mean((x - mu) ** 2, axis=-1, keepdims=True)
    return (x - mu) * lax.rsqrt(var + eps) * gamma + beta


def encoder_layer_kernel(
    q_ref, k_ref, v_ref,
    wq_ref, wk_ref, wv_ref, wo_ref, w1_ref, w2_ref,
    vecs_ref, bf1_ref,
    o_ref,
    ctx_ref,
    *, n_head: int, s_orig: int, is_causal: bool,
):
    Bt, S, D = q_ref.shape
    hd = D // n_head
    M = Bt * S
    f32 = jnp.float32
    cdt = wq_ref.dtype            # MXU operand dtype (bf16 default); accumulation is always f32

    def mm(a_cdt, w_ref):
        # (M, in) @ (in, out); weights already transposed to (in, out) on the host.
        return jnp.dot(a_cdt, w_ref[...], preferred_element_type=f32)

    # Packed (1, D) vectors: bq, bk, bv, bo, g1, be1, bf2, g2, be2 (single slab, one DMA).
    vecs = vecs_ref[...]
    bq, bk, bv, bo = vecs[0:1], vecs[1:2], vecs[2:3], vecs[3:4]
    g1, be1, bf2, g2, be2 = vecs[4:5], vecs[5:6], vecs[6:7], vecs[7:8], vecs[8:9]
    bf1 = bf1_ref[...]

    q_flat = q_ref[...].reshape(M, D)     # S is 8-aligned (host padding) -> free reshape

    # --- input projections (1/sqrt(hd) already folded into wq/bq); cast operands to cdt once ---
    Qp = (mm(q_flat.astype(cdt), wq_ref) + bq).astype(cdt).reshape(Bt, S, D)
    Kp = (mm(k_ref[...].reshape(M, D).astype(cdt), wk_ref) + bk).astype(cdt).reshape(Bt, S, D)
    Vp = (mm(v_ref[...].reshape(M, D).astype(cdt), wv_ref) + bv).astype(cdt).reshape(Bt, S, D)

    # --- additive attention bias (causal and/or padded-key masking), hoisted out of head loop ---
    neg = jnp.float32(-1e30)      # large finite negative: no NaN risk on degenerate rows
    bias = None
    if is_causal or (s_orig < S):
        col = lax.broadcasted_iota(jnp.int32, (S, S), 1)
        masked = (col >= s_orig) if (s_orig < S) else None
        if is_causal:
            row = lax.broadcasted_iota(jnp.int32, (S, S), 0)
            causal = col > row
            masked = causal if masked is None else jnp.logical_or(causal, masked)
        bias = jnp.where(masked, neg, jnp.float32(0.0))

    # --- attention: static head loop, batched over the block's batch dim.  Each head's context
    #     goes to the ctx VMEM scratch at a static column offset (bounds live ranges, no concat).
    for h in range(n_head):
        sl = slice(h * hd, (h + 1) * hd)
        s = jnp.einsum("bqd,bkd->bqk", Qp[:, :, sl], Kp[:, :, sl],
                       preferred_element_type=f32)                       # (Bt, S, S) f32
        if bias is not None:
            s = s + bias
        m = jnp.max(s, axis=-1, keepdims=True)
        p = jnp.exp(s - m)                                               # f32 softmax statistics
        inv_l = pl.reciprocal(jnp.sum(p, axis=-1, keepdims=True), approx=True)
        ctx_h = jnp.einsum("bqk,bkd->bqd", p.astype(cdt), Vp[:, :, sl],
                           preferred_element_type=f32) * inv_l
        ctx_ref[:, :, sl] = ctx_h.astype(ctx_ref.dtype)

    # --- single full-width output projection ---
    attn = mm(ctx_ref[...].reshape(M, D), wo_ref) + bo                   # (M, D) f32

    # --- residuals / norms / FFN (dropout = identity) ---
    x = 2.0 * q_flat.astype(f32) + attn                                  # q + (q + attn)
    x = _layernorm(x, g1, be1)

    h1 = jnp.maximum(mm(x.astype(cdt), w1_ref) + bf1, 0.0).astype(cdt)   # (M, 4D), cast once
    ffn = mm(h1, w2_ref) + bf2                                           # (M, D) f32

    x = 2.0 * x + ffn                                                    # x + (x + ffn(x))
    x = _layernorm(x, g2, be2)

    o_ref[...] = x.reshape(Bt, S, D).astype(o_ref.dtype)


def _tpu_vmem_capacity_bytes():
    try:
        return int(pltpu.get_tpu_info().vmem_capacity_bytes)
    except Exception:
        return None


def _pick_block_b(B, S, target_rows):
    bt = max(1, min(B, max(1, target_rows // max(S, 1))))
    while B % bt:
        bt -= 1
    if B >= 2:                     # keep >= 2 grid steps so "parallel" can use both v7x TCs
        bt = min(bt, B // 2)
        while B % bt:
            bt -= 1
    return bt


def _est_step_vmem_bytes(block_b, S, D, io_itemsize, w_itemsize):
    blk = block_b * S * D
    return (3 * 2 * blk * io_itemsize            # q/k/v input blocks, double buffered
            + 2 * blk * io_itemsize              # output block, double buffered
            + blk * w_itemsize                   # ctx scratch (compute dtype)
            + blk * (3 * 4 + 7 * w_itemsize)     # f32 x/attn/ffn + cdt Qp/Kp/Vp + (M,4D) h1
            + 2 * block_b * S * S * 4)           # per-head scores + probs (f32)


def transformer_encoder_layer(q, k, v, params, *, n_head: int, is_causal: bool = False,
                              matmul_dtype=jnp.bfloat16, io_dtype=None, block_b=None):
    B, S, D = q.shape
    assert D % n_head == 0
    hd = D // n_head
    scale = 1.0 / math.sqrt(hd)
    f32 = jnp.float32
    wdt = matmul_dtype
    w_itemsize = np.dtype(wdt).itemsize

    if io_dtype is not None:       # v5e: bf16 activations halve HBM traffic of the q/k/v/out slabs
        q = q.astype(io_dtype)
        k = k.astype(io_dtype)
        v = v.astype(io_dtype)
    out_dtype = q.dtype
    io_itemsize = np.dtype(out_dtype).itemsize

    # --- host-side padding of S to a sublane-aligned multiple of 8 ---
    S_pad = ((S + 7) // 8) * 8
    if S_pad != S:
        pad = ((0, 0), (0, S_pad - S), (0, 0))
        q, k, v = jnp.pad(q, pad), jnp.pad(k, pad), jnp.pad(v, pad)

    # --- host-side weight prep: (in, out) layout, attention scale folded into Wq/bq,
    #     big matrices stored in the MXU operand dtype, small vectors packed into one slab ---
    wq = (params["wq"].astype(f32).T * scale).astype(wdt)
    wk = params["wk"].astype(f32).T.astype(wdt)
    wv = params["wv"].astype(f32).T.astype(wdt)
    wo = params["wo"].astype(f32).T.astype(wdt)
    w1 = params["w1"].astype(f32).T.astype(wdt)
    w2 = params["w2"].astype(f32).T.astype(wdt)
    vec_rows = jnp.stack([
        params["bq"].astype(f32) * scale,
        params["bk"].astype(f32),
        params["bv"].astype(f32),
        params["bo"].astype(f32),
        params["g1"].astype(f32),
        params["be1"].astype(f32),
        params["bf2"].astype(f32),
        params["g2"].astype(f32),
        params["be2"].astype(f32),
    ])                                                               # (9, D)
    vecs = jnp.pad(vec_rows, ((0, 16 - vec_rows.shape[0]), (0, 0)))  # (16, D), sublane aligned
    bf1 = params["bf1"].astype(f32).reshape(1, 4 * D)
    consts = [wq, wk, wv, wo, w1, w2, vecs, bf1]

    # --- generation-aware VMEM budget and batch-block sizing ---
    vmem_cap = _tpu_vmem_capacity_bytes()
    if vmem_cap is None:
        vmem_limit = None
        target_rows = 256
    else:
        vmem_limit = int(0.85 * vmem_cap)                       # headroom for Mosaic scratch/DMA
        target_rows = 512 if vmem_cap >= 96 * 2 ** 20 else 320   # v5e/v6e (128 MiB) vs v7x (64)

    if block_b is None:
        block_b = _pick_block_b(B, S_pad, target_rows)
        if vmem_limit is not None:
            const_bytes = 2 * sum(int(c.size) * c.dtype.itemsize for c in consts)
            budget = int(0.8 * vmem_limit) - const_bytes
            while (block_b > 1 and budget > 0 and
                   _est_step_vmem_bytes(block_b, S_pad, D, io_itemsize, w_itemsize) > budget):
                block_b -= 1
                while B % block_b:
                    block_b -= 1
    assert B % block_b == 0
    grid = (B // block_b,)

    seq_spec = pl.BlockSpec((block_b, S_pad, D), lambda b: (b, 0, 0))
    out_spec = pl.BlockSpec((block_b, S_pad, D), lambda b: (b, 0, 0))

    def const_spec(arr):
        # Full-array block + constant index map -> DMA'd once, reused across every grid step.
        return pl.BlockSpec(arr.shape, lambda b, _nd=arr.ndim: (0,) * _nd)

    kern = functools.partial(encoder_layer_kernel,
                             n_head=n_head, s_orig=S, is_causal=is_causal)

    cparams = dict(dimension_semantics=("parallel",))
    if vmem_limit is not None:
        cparams["vmem_limit_bytes"] = vmem_limit

    out = pl.pallas_call(
        kern,
        out_shape=jax.ShapeDtypeStruct((B, S_pad, D), out_dtype),
        grid_spec=pltpu.PrefetchScalarGridSpec(
            num_scalar_prefetch=0,
            grid=grid,
            in_specs=[seq_spec, seq_spec, seq_spec] + [const_spec(c) for c in consts],
            out_specs=out_spec,
            scratch_shapes=[pltpu.VMEM((block_b, S_pad, D), wdt)],   # per-block ctx buffer
        ),
        compiler_params=pltpu.CompilerParams(**cparams),
    )(q, k, v, *consts)

    if S_pad != S:
        out = out[:, :S, :]
    return out


def reference(q, k, v, p, n_head, is_causal=False):
    # Pure-JAX reference of the same forward pass (for self-check).
    B, S, D = q.shape
    hd = D // n_head

    def ln(x, g, b, eps=1e-5):
        mu = x.mean(-1, keepdims=True)
        var = ((x - mu) ** 2).mean(-1, keepdims=True)
        return (x - mu) / jnp.sqrt(var + eps) * g + b

    Qp = q @ p["wq"].T + p["bq"]
    Kp = k @ p["wk"].T + p["bk"]
    Vp = v @ p["wv"].T + p["bv"]

    def split(x):
        return x.reshape(B, S, n_head, hd).transpose(0, 2, 1, 3)

    Qh, Kh, Vh = split(Qp), split(Kp), split(Vp)
    scores = jnp.einsum("bhqd,bhkd->bhqk", Qh, Kh) / jnp.sqrt(jnp.float32(hd))
    if is_causal:
        scores = scores + jnp.triu(jnp.full((S, S), -jnp.inf, jnp.float32), k=1)
    probs = jax.nn.softmax(scores, axis=-1)
    ctx = jnp.einsum("bhqk,bhkd->bhqd", probs, Vh).transpose(0, 2, 1, 3).reshape(B, S, D)
    attn = ctx @ p["wo"].T + p["bo"]

    x = 2.0 * q + attn
    x = ln(x, p["g1"], p["be1"])
    ffn = jnp.maximum(x @ p["w1"].T + p["bf1"], 0.0) @ p["w2"].T + p["bf2"]
    x = 2.0 * x + ffn
    return ln(x, p["g2"], p["be2"])


def make_params(key, d_model):
    ks = jax.random.split(key, 12)
    D = d_model
    in_proj_w = jax.random.normal(ks[0], (3 * D, D), jnp.float32) * 0.05
    in_proj_b = jax.random.normal(ks[1], (3 * D,), jnp.float32) * 0.02
    return {
        "wq": in_proj_w[0 * D:1 * D],
        "wk": in_proj_w[1 * D:2 * D],
        "wv": in_proj_w[2 * D:3 * D],
        "bq": in_proj_b[0 * D:1 * D],
        "bk": in_proj_b[1 * D:2 * D],
        "bv": in_proj_b[2 * D:3 * D],
        "wo": jax.random.normal(ks[2], (D, D), jnp.float32) * 0.05,
        "bo": jax.random.normal(ks[3], (D,), jnp.float32) * 0.02,
        "g1": 1.0 + 0.1 * jax.random.normal(ks[4], (D,), jnp.float32),
        "be1": 0.1 * jax.random.normal(ks[5], (D,), jnp.float32),
        "w1": jax.random.normal(ks[6], (4 * D, D), jnp.float32) * 0.05,
        "bf1": jax.random.normal(ks[7], (4 * D,), jnp.float32) * 0.02,
        "w2": jax.random.normal(ks[8], (D, 4 * D), jnp.float32) * 0.05,
        "bf2": jax.random.normal(ks[9], (D,), jnp.float32) * 0.02,
        "g2": 1.0 + 0.1 * jax.random.normal(ks[10], (D,), jnp.float32),
        "be2": 0.1 * jax.random.normal(ks[11], (D,), jnp.float32),
    }


if __name__ == "__main__":
    B, S, d_model, n_head = 2, 8, 32, 4

    key = jax.random.PRNGKey(0)
    kq, kk, kv, kp = jax.random.split(key, 4)
    q = jax.random.normal(kq, (B, S, d_model), jnp.float32)
    k = jax.random.normal(kk, (B, S, d_model), jnp.float32)
    v = jax.random.normal(kv, (B, S, d_model), jnp.float32)
    params = make_params(kp, d_model)
    ref = reference(q, k, v, params, n_head, is_causal=False)

    # Default path: bf16 MXU operands, f32 accumulation / softmax / LayerNorm.
    out_bf = jax.block_until_ready(
        transformer_encoder_layer(q, k, v, params, n_head=n_head))
    assert out_bf.shape == (B, S, d_model)
    assert bool(jnp.all(jnp.isfinite(out_bf)))
    err_bf = float(jnp.max(jnp.abs(out_bf - ref)))
    assert err_bf < 1.5e-1, f"bf16 mismatch vs reference: {err_bf}"

    # f32 MXU operands: near-exact parity, non-causal and causal.
    out_f32 = jax.block_until_ready(
        transformer_encoder_layer(q, k, v, params, n_head=n_head, matmul_dtype=jnp.float32))
    err_f32 = float(jnp.max(jnp.abs(out_f32 - ref)))
    assert err_f32 < 1e-2, f"f32 mismatch vs reference: {err_f32}"

    out_c = jax.block_until_ready(
        transformer_encoder_layer(q, k, v, params, n_head=n_head, matmul_dtype=jnp.float32,
                                  is_causal=True))
    ref_c = reference(q, k, v, params, n_head, is_causal=True)
    err_c = float(jnp.max(jnp.abs(out_c - ref_c)))
    assert err_c < 1e-2, f"causal f32 mismatch vs reference: {err_c}"

    # S not a multiple of 8: host-side pad + in-kernel key mask (+ causal), output sliced back.
    S2 = 10
    kq2, kk2, kv2 = jax.random.split(kq, 3)
    q2 = jax.random.normal(kq2, (B, S2, d_model), jnp.float32)
    k2 = jax.random.normal(kk2, (B, S2, d_model), jnp.float32)
    v2 = jax.random.normal(kv2, (B, S2, d_model), jnp.float32)
    out_p = jax.block_until_ready(
        transformer_encoder_layer(q2, k2, v2, params, n_head=n_head, matmul_dtype=jnp.float32,
                                  is_causal=True))
    ref_p = reference(q2, k2, v2, params, n_head, is_causal=True)
    assert out_p.shape == (B, S2, d_model)
    err_p = float(jnp.max(jnp.abs(out_p - ref_p)))
    assert err_p < 1e-2, f"padded causal f32 mismatch vs reference: {err_p}"

    print("KERNEL_OK")
</pallas_src>

<mosaic_0001>
module attributes {stable_mosaic.version = 11 : i64} {
  func.func @encoder_layer_kernel(%arg0: i32, %arg1: memref<1x8x32xf32, #tpu.memory_space<vmem>>, %arg2: memref<1x8x32xf32, #tpu.memory_space<vmem>>, %arg3: memref<1x8x32xf32, #tpu.memory_space<vmem>>, %arg4: memref<32x32xbf16, #tpu.memory_space<vmem>>, %arg5: memref<32x32xbf16, #tpu.memory_space<vmem>>, %arg6: memref<32x32xbf16, #tpu.memory_space<vmem>>, %arg7: memref<32x32xbf16, #tpu.memory_space<vmem>>, %arg8: memref<32x128xbf16, #tpu.memory_space<vmem>>, %arg9: memref<128x32xbf16, #tpu.memory_space<vmem>>, %arg10: memref<16x32xf32, #tpu.memory_space<vmem>>, %arg11: memref<1x128xf32, #tpu.memory_space<vmem>>, %arg12: memref<1x8x32xf32, #tpu.memory_space<vmem>>, %arg13: memref<1x8x32xbf16, #tpu.memory_space<vmem>>) attributes {dimension_semantics = [#tpu.dimension_semantics<parallel>], iteration_bounds = array<i64: 2>, scalar_prefetch = 0 : i64, scratch_operands = 1 : i64, tpu.core_type = #tpu.core_type<tc>, window_params = [{transform_indices = @transform_0, window_bounds = array<i64: 1, 8, 32>}, {transform_indices = @transform_1, window_bounds = array<i64: 1, 8, 32>}, {transform_indices = @transform_2, window_bounds = array<i64: 1, 8, 32>}, {pipeline_mode = #tpu.pipeline_mode<synchronous>, transform_indices = @transform_3, window_bounds = array<i64: 32, 32>}, {pipeline_mode = #tpu.pipeline_mode<synchronous>, transform_indices = @transform_4, window_bounds = array<i64: 32, 32>}, {pipeline_mode = #tpu.pipeline_mode<synchronous>, transform_indices = @transform_5, window_bounds = array<i64: 32, 32>}, {pipeline_mode = #tpu.pipeline_mode<synchronous>, transform_indices = @transform_6, window_bounds = array<i64: 32, 32>}, {pipeline_mode = #tpu.pipeline_mode<synchronous>, transform_indices = @transform_7, window_bounds = array<i64: 32, 128>}, {pipeline_mode = #tpu.pipeline_mode<synchronous>, transform_indices = @transform_8, window_bounds = array<i64: 128, 32>}, {pipeline_mode = #tpu.pipeline_mode<synchronous>, transform_indices = @transform_9, window_bounds = array<i64: 16, 32>}, {pipeline_mode = #tpu.pipeline_mode<synchronous>, transform_indices = @transform_10, window_bounds = array<i64: 1, 128>}, {transform_indices = @transform_11, window_bounds = array<i64: 1, 8, 32>}]} {
    %c0 = arith.constant 0 : index
    %c0_0 = arith.constant 0 : index
    %0 = vector.load %arg10[%c0, %c0_0] : memref<16x32xf32, #tpu.memory_space<vmem>>, vector<16x32xf32>
    %1 = vector.extract_strided_slice %0 {offsets = [0, 0], sizes = [1, 32], strides = [1, 1]} : vector<16x32xf32> to vector<1x32xf32>
    %2 = vector.extract_strided_slice %0 {offsets = [1, 0], sizes = [1, 32], strides = [1, 1]} : vector<16x32xf32> to vector<1x32xf32>
    %3 = vector.extract_strided_slice %0 {offsets = [2, 0], sizes = [1, 32], strides = [1, 1]} : vector<16x32xf32> to vector<1x32xf32>
    %4 = vector.extract_strided_slice %0 {offsets = [3, 0], sizes = [1, 32], strides = [1, 1]} : vector<16x32xf32> to vector<1x32xf32>
    %5 = vector.extract_strided_slice %0 {offsets = [4, 0], sizes = [1, 32], strides = [1, 1]} : vector<16x32xf32> to vector<1x32xf32>
    %6 = vector.extract_strided_slice %0 {offsets = [5, 0], sizes = [1, 32], strides = [1, 1]} : vector<16x32xf32> to vector<1x32xf32>
    %7 = vector.extract_strided_slice %0 {offsets = [6, 0], sizes = [1, 32], strides = [1, 1]} : vector<16x32xf32> to vector<1x32xf32>
    %8 = vector.extract_strided_slice %0 {offsets = [7, 0], sizes = [1, 32], strides = [1, 1]} : vector<16x32xf32> to vector<1x32xf32>
    %9 = vector.extract_strided_slice %0 {offsets = [8, 0], sizes = [1, 32], strides = [1, 1]} : vector<16x32xf32> to vector<1x32xf32>
    %c0_1 = arith.constant 0 : index
    %c0_2 = arith.constant 0 : index
    %10 = vector.load %arg11[%c0_1, %c0_2] : memref<1x128xf32, #tpu.memory_space<vmem>>, vector<1x128xf32>
    %c0_3 = arith.constant 0 : index
    %c0_4 = arith.constant 0 : index
    %c0_5 = arith.constant 0 : index
    %11 = vector.load %arg1[%c0_3, %c0_4, %c0_5] : memref<1x8x32xf32, #tpu.memory_space<vmem>>, vector<1x8x32xf32>
    %12 = vector.shape_cast %11 : vector<1x8x32xf32> to vector<8x32xf32>
    %13 = arith.truncf %12 : vector<8x32xf32> to vector<8x32xbf16>
    %c0_6 = arith.constant 0 : index
    %c0_7 = arith.constant 0 : index
    %14 = vector.load %arg4[%c0_6, %c0_7] : memref<32x32xbf16, #tpu.memory_space<vmem>>, vector<32x32xbf16>
    %cst = arith.constant dense<0.000000e+00> : vector<8x32xf32>
    %15 = tpu.matmul %13, %14, %cst {dimension_numbers = #tpu.dot_dimension_numbers<[1], [0], [0], [1], [0, 0, 1, 1], [], []>} : vector<8x32xbf16>, vector<32x32xbf16>, vector<8x32xf32> -> vector<8x32xf32>
    %16 = vector.broadcast %1 : vector<1x32xf32> to vector<8x32xf32>
    %17 = arith.addf %15, %16 : vector<8x32xf32>
    %18 = arith.truncf %17 : vector<8x32xf32> to vector<8x32xbf16>
    %19 = vector.shape_cast %18 : vector<8x32xbf16> to vector<1x8x32xbf16>
    %c0_8 = arith.constant 0 : index
    %c0_9 = arith.constant 0 : index
    %c0_10 = arith.constant 0 : index
    %20 = vector.load %arg2[%c0_8, %c0_9, %c0_10] : memref<1x8x32xf32, #tpu.memory_space<vmem>>, vector<1x8x32xf32>
    %21 = vector.shape_cast %20 : vector<1x8x32xf32> to vector<8x32xf32>
    %22 = arith.truncf %21 : vector<8x32xf32> to vector<8x32xbf16>
    %c0_11 = arith.constant 0 : index
    %c0_12 = arith.constant 0 : index
    %23 = vector.load %arg5[%c0_11, %c0_12] : memref<32x32xbf16, #tpu.memory_space<vmem>>, vector<32x32xbf16>
    %cst_13 = arith.constant dense<0.000000e+00> : vector<8x32xf32>
    %24 = tpu.matmul %22, %23, %cst_13 {dimension_numbers = #tpu.dot_dimension_numbers<[1], [0], [0], [1], [0, 0, 1, 1], [], []>} : vector<8x32xbf16>, vector<32x32xbf16>, vector<8x32xf32> -> vector<8x32xf32>
    %25 = vector.broadcast %2 : vector<1x32xf32> to vector<8x32xf32>
    %26 = arith.addf %24, %25 : vector<8x32xf32>
    %27 = arith.truncf %26 : vector<8x32xf32> to vector<8x32xbf16>
    %28 = vector.shape_cast %27 : vector<8x32xbf16> to vector<1x8x32xbf16>
    %c0_14 = arith.constant 0 : index
    %c0_15 = arith.constant 0 : index
    %c0_16 = arith.constant 0 : index
    %29 = vector.load %arg3[%c0_14, %c0_15, %c0_16] : memref<1x8x32xf32, #tpu.memory_space<vmem>>, vector<1x8x32xf32>
    %30 = vector.shape_cast %29 : vector<1x8x32xf32> to vector<8x32xf32>
    %31 = arith.truncf %30 : vector<8x32xf32> to vector<8x32xbf16>
    %c0_17 = arith.constant 0 : index
    %c0_18 = arith.constant 0 : index
    %32 = vector.load %arg6[%c0_17, %c0_18] : memref<32x32xbf16, #tpu.memory_space<vmem>>, vector<32x32xbf16>
    %cst_19 = arith.constant dense<0.000000e+00> : vector<8x32xf32>
    %33 = tpu.matmul %31, %32, %cst_19 {dimension_numbers = #tpu.dot_dimension_numbers<[1], [0], [0], [1], [0, 0, 1, 1], [], []>} : vector<8x32xbf16>, vector<32x32xbf16>, vector<8x32xf32> -> vector<8x32xf32>
    %34 = vector.broadcast %3 : vector<1x32xf32> to vector<8x32xf32>
    %35 = arith.addf %33, %34 : vector<8x32xf32>
    %36 = arith.truncf %35 : vector<8x32xf32> to vector<8x32xbf16>
    %37 = vector.shape_cast %36 : vector<8x32xbf16> to vector<1x8x32xbf16>
    %38 = vector.extract_strided_slice %19 {offsets = [0, 0, 0], sizes = [1, 8, 8], strides = [1, 1, 1]} : vector<1x8x32xbf16> to vector<1x8x8xbf16>
    %39 = vector.extract_strided_slice %28 {offsets = [0, 0, 0], sizes = [1, 8, 8], strides = [1, 1, 1]} : vector<1x8x32xbf16> to vector<1x8x8xbf16>
    "tpu.trace_start"() <{level = 10 : i32, message = "bqd,bkd->bqk"}> : () -> ()
    %cst_20 = arith.constant dense<0.000000e+00> : vector<1x8x8xf32>
    %40 = tpu.matmul %38, %39, %cst_20 {dimension_numbers = #tpu.dot_dimension_numbers<[2], [2], [1], [1], [0, 0, 0, 1, 1, 1], [0], [0]>} : vector<1x8x8xbf16>, vector<1x8x8xbf16>, vector<1x8x8xf32> -> vector<1x8x8xf32>
    "tpu.trace_stop"() : () -> ()
    %cst_21 = arith.constant dense<0xFF800000> : vector<1x8xf32>
    %41 = vector.multi_reduction <maximumf>, %40, %cst_21 [2] : vector<1x8x8xf32> to vector<1x8xf32>
    %42 = vector.shape_cast %41 : vector<1x8xf32> to vector<1x8x1xf32>
    %43 = vector.broadcast %42 : vector<1x8x1xf32> to vector<1x8x8xf32>
    %44 = arith.subf %40, %43 : vector<1x8x8xf32>
    %45 = math.exp %44 : vector<1x8x8xf32>
    %cst_22 = arith.constant dense<0.000000e+00> : vector<1x8xf32>
    %46 = vector.multi_reduction <add>, %45, %cst_22 [2] : vector<1x8x8xf32> to vector<1x8xf32>
    %47 = vector.shape_cast %46 : vector<1x8xf32> to vector<1x8x1xf32>
    %48 = tpu.reciprocal %47 {approx = true} : vector<1x8x1xf32> -> vector<1x8x1xf32>
    %49 = arith.truncf %45 : vector<1x8x8xf32> to vector<1x8x8xbf16>
    %50 = vector.extract_strided_slice %37 {offsets = [0, 0, 0], sizes = [1, 8, 8], strides = [1, 1, 1]} : vector<1x8x32xbf16> to vector<1x8x8xbf16>
    "tpu.trace_start"() <{level = 10 : i32, message = "bqk,bkd->bqd"}> : () -> ()
    %cst_23 = arith.constant dense<0.000000e+00> : vector<1x8x8xf32>
    %51 = tpu.matmul %49, %50, %cst_23 {dimension_numbers = #tpu.dot_dimension_numbers<[2], [1], [1], [2], [0, 0, 0, 1, 1, 2], [0], [0]>} : vector<1x8x8xbf16>, vector<1x8x8xbf16>, vector<1x8x8xf32> -> vector<1x8x8xf32>
    "tpu.trace_stop"() : () -> ()
    %52 = vector.broadcast %48 : vector<1x8x1xf32> to vector<1x8x8xf32>
    %53 = arith.mulf %51, %52 : vector<1x8x8xf32>
    %54 = arith.truncf %53 : vector<1x8x8xf32> to vector<1x8x8xbf16>
    %c0_24 = arith.constant 0 : index
    %c0_25 = arith.constant 0 : index
    %c0_26 = arith.constant 0 : index
    %55 = vector.load %arg13[%c0_24, %c0_25, %c0_26] : memref<1x8x32xbf16, #tpu.memory_space<vmem>>, vector<1x8x8xbf16>
    tpu.vector_store %arg13[%c0_24, %c0_25, %c0_26], %54 {strides = array<i32>} : memref<1x8x32xbf16, #tpu.memory_space<vmem>>, vector<1x8x8xbf16>,
    %56 = vector.extract_strided_slice %19 {offsets = [0, 0, 8], sizes = [1, 8, 8], strides = [1, 1, 1]} : vector<1x8x32xbf16> to vector<1x8x8xbf16>
    %57 = vector.extract_strided_slice %28 {offsets = [0, 0, 8], sizes = [1, 8, 8], strides = [1, 1, 1]} : vector<1x8x32xbf16> to vector<1x8x8xbf16>
    "tpu.trace_start"() <{level = 10 : i32, message = "bqd,bkd->bqk"}> : () -> ()
    %cst_27 = arith.constant dense<0.000000e+00> : vector<1x8x8xf32>
    %58 = tpu.matmul %56, %57, %cst_27 {dimension_numbers = #tpu.dot_dimension_numbers<[2], [2], [1], [1], [0, 0, 0, 1, 1, 1], [0], [0]>} : vector<1x8x8xbf16>, vector<1x8x8xbf16>, vector<1x8x8xf32> -> vector<1x8x8xf32>
    "tpu.trace_stop"() : () -> ()
    %cst_28 = arith.constant dense<0xFF800000> : vector<1x8xf32>
    %59 = vector.multi_reduction <maximumf>, %58, %cst_28 [2] : vector<1x8x8xf32> to vector<1x8xf32>
    %60 = vector.shape_cast %59 : vector<1x8xf32> to vector<1x8x1xf32>
    %61 = vector.broadcast %60 : vector<1x8x1xf32> to vector<1x8x8xf32>
    %62 = arith.subf %58, %61 : vector<1x8x8xf32>
    %63 = math.exp %62 : vector<1x8x8xf32>
    %cst_29 = arith.constant dense<0.000000e+00> : vector<1x8xf32>
    %64 = vector.multi_reduction <add>, %63, %cst_29 [2] : vector<1x8x8xf32> to vector<1x8xf32>
    %65 = vector.shape_cast %64 : vector<1x8xf32> to vector<1x8x1xf32>
    %66 = tpu.reciprocal %65 {approx = true} : vector<1x8x1xf32> -> vector<1x8x1xf32>
    %67 = arith.truncf %63 : vector<1x8x8xf32> to vector<1x8x8xbf16>
    %68 = vector.extract_strided_slice %37 {offsets = [0, 0, 8], sizes = [1, 8, 8], strides = [1, 1, 1]} : vector<1x8x32xbf16> to vector<1x8x8xbf16>
    "tpu.trace_start"() <{level = 10 : i32, message = "bqk,bkd->bqd"}> : () -> ()
    %cst_30 = arith.constant dense<0.000000e+00> : vector<1x8x8xf32>
    %69 = tpu.matmul %67, %68, %cst_30 {dimension_numbers = #tpu.dot_dimension_numbers<[2], [1], [1], [2], [0, 0, 0, 1, 1, 2], [0], [0]>} : vector<1x8x8xbf16>, vector<1x8x8xbf16>, vector<1x8x8xf32> -> vector<1x8x8xf32>
    "tpu.trace_stop"() : () -> ()
    %70 = vector.broadcast %66 : vector<1x8x1xf32> to vector<1x8x8xf32>
    %71 = arith.mulf %69, %70 : vector<1x8x8xf32>
    %72 = arith.truncf %71 : vector<1x8x8xf32> to vector<1x8x8xbf16>
    %c0_31 = arith.constant 0 : index
    %c0_32 = arith.constant 0 : index
    %c8 = arith.constant 8 : index
    %73 = vector.load %arg13[%c0_31, %c0_32, %c8] : memref<1x8x32xbf16, #tpu.memory_space<vmem>>, vector<1x8x8xbf16>
    tpu.vector_store %arg13[%c0_31, %c0_32, %c8], %72 {strides = array<i32>} : memref<1x8x32xbf16, #tpu.memory_space<vmem>>, vector<1x8x8xbf16>,
    %74 = vector.extract_strided_slice %19 {offsets = [0, 0, 16], sizes = [1, 8, 8], strides = [1, 1, 1]} : vector<1x8x32xbf16> to vector<1x8x8xbf16>
    %75 = vector.extract_strided_slice %28 {offsets = [0, 0, 16], sizes = [1, 8, 8], strides = [1, 1, 1]} : vector<1x8x32xbf16> to vector<1x8x8xbf16>
    "tpu.trace_start"() <{level = 10 : i32, message = "bqd,bkd->bqk"}> : () -> ()
    %cst_33 = arith.constant dense<0.000000e+00> : vector<1x8x8xf32>
    %76 = tpu.matmul %74, %75, %cst_33 {dimension_numbers = #tpu.dot_dimension_numbers<[2], [2], [1], [1], [0, 0, 0, 1, 1, 1], [0], [0]>} : vector<1x8x8xbf16>, vector<1x8x8xbf16>, vector<1x8x8xf32> -> vector<1x8x8xf32>
    "tpu.trace_stop"() : () -> ()
    %cst_34 = arith.constant dense<0xFF800000> : vector<1x8xf32>
    %77 = vector.multi_reduction <maximumf>, %76, %cst_34 [2] : vector<1x8x8xf32> to vector<1x8xf32>
    %78 = vector.shape_cast %77 : vector<1x8xf32> to vector<1x8x1xf32>
    %79 = vector.broadcast %78 : vector<1x8x1xf32> to vector<1x8x8xf32>
    %80 = arith.subf %76, %79 : vector<1x8x8xf32>
    %81 = math.exp %80 : vector<1x8x8xf32>
    %cst_35 = arith.constant dense<0.000000e+00> : vector<1x8xf32>
    %82 = vector.multi_reduction <add>, %81, %cst_35 [2] : vector<1x8x8xf32> to vector<1x8xf32>
    %83 = vector.shape_cast %82 : vector<1x8xf32> to vector<1x8x1xf32>
    %84 = tpu.reciprocal %83 {approx = true} : vector<1x8x1xf32> -> vector<1x8x1xf32>
    %85 = arith.truncf %81 : vector<1x8x8xf32> to vector<1x8x8xbf16>
    %86 = vector.extract_strided_slice %37 {offsets = [0, 0, 16], sizes = [1, 8, 8], strides = [1, 1, 1]} : vector<1x8x32xbf16> to vector<1x8x8xbf16>
    "tpu.trace_start"() <{level = 10 : i32, message = "bqk,bkd->bqd"}> : () -> ()
    %cst_36 = arith.constant dense<0.000000e+00> : vector<1x8x8xf32>
    %87 = tpu.matmul %85, %86, %cst_36 {dimension_numbers = #tpu.dot_dimension_numbers<[2], [1], [1], [2], [0, 0, 0, 1, 1, 2], [0], [0]>} : vector<1x8x8xbf16>, vector<1x8x8xbf16>, vector<1x8x8xf32> -> vector<1x8x8xf32>
    "tpu.trace_stop"() : () -> ()
    %88 = vector.broadcast %84 : vector<1x8x1xf32> to vector<1x8x8xf32>
    %89 = arith.mulf %87, %88 : vector<1x8x8xf32>
    %90 = arith.truncf %89 : vector<1x8x8xf32> to vector<1x8x8xbf16>
    %c0_37 = arith.constant 0 : index
    %c0_38 = arith.constant 0 : index
    %c16 = arith.constant 16 : index
    %91 = vector.load %arg13[%c0_37, %c0_38, %c16] : memref<1x8x32xbf16, #tpu.memory_space<vmem>>, vector<1x8x8xbf16>
    tpu.vector_store %arg13[%c0_37, %c0_38, %c16], %90 {strides = array<i32>} : memref<1x8x32xbf16, #tpu.memory_space<vmem>>, vector<1x8x8xbf16>,
    %92 = vector.extract_strided_slice %19 {offsets = [0, 0, 24], sizes = [1, 8, 8], strides = [1, 1, 1]} : vector<1x8x32xbf16> to vector<1x8x8xbf16>
    %93 = vector.extract_strided_slice %28 {offsets = [0, 0, 24], sizes = [1, 8, 8], strides = [1, 1, 1]} : vector<1x8x32xbf16> to vector<1x8x8xbf16>
    "tpu.trace_start"() <{level = 10 : i32, message = "bqd,bkd->bqk"}> : () -> ()
    %cst_39 = arith.constant dense<0.000000e+00> : vector<1x8x8xf32>
    %94 = tpu.matmul %92, %93, %cst_39 {dimension_numbers = #tpu.dot_dimension_numbers<[2], [2], [1], [1], [0, 0, 0, 1, 1, 1], [0], [0]>} : vector<1x8x8xbf16>, vector<1x8x8xbf16>, vector<1x8x8xf32> -> vector<1x8x8xf32>
    "tpu.trace_stop"() : () -> ()
    %cst_40 = arith.constant dense<0xFF800000> : vector<1x8xf32>
    %95 = vector.multi_reduction <maximumf>, %94, %cst_40 [2] : vector<1x8x8xf32> to vector<1x8xf32>
    %96 = vector.shape_cast %95 : vector<1x8xf32> to vector<1x8x1xf32>
    %97 = vector.broadcast %96 : vector<1x8x1xf32> to vector<1x8x8xf32>
    %98 = arith.subf %94, %97 : vector<1x8x8xf32>
    %99 = math.exp %98 : vector<1x8x8xf32>
    %cst_41 = arith.constant dense<0.000000e+00> : vector<1x8xf32>
    %100 = vector.multi_reduction <add>, %99, %cst_41 [2] : vector<1x8x8xf32> to vector<1x8xf32>
    %101 = vector.shape_cast %100 : vector<1x8xf32> to vector<1x8x1xf32>
    %102 = tpu.reciprocal %101 {approx = true} : vector<1x8x1xf32> -> vector<1x8x1xf32>
    %103 = arith.truncf %99 : vector<1x8x8xf32> to vector<1x8x8xbf16>
    %104 = vector.extract_strided_slice %37 {offsets = [0, 0, 24], sizes = [1, 8, 8], strides = [1, 1, 1]} : vector<1x8x32xbf16> to vector<1x8x8xbf16>
    "tpu.trace_start"() <{level = 10 : i32, message = "bqk,bkd->bqd"}> : () -> ()
    %cst_42 = arith.constant dense<0.000000e+00> : vector<1x8x8xf32>
    %105 = tpu.matmul %103, %104, %cst_42 {dimension_numbers = #tpu.dot_dimension_numbers<[2], [1], [1], [2], [0, 0, 0, 1, 1, 2], [0], [0]>} : vector<1x8x8xbf16>, vector<1x8x8xbf16>, vector<1x8x8xf32> -> vector<1x8x8xf32>
    "tpu.trace_stop"() : () -> ()
    %106 = vector.broadcast %102 : vector<1x8x1xf32> to vector<1x8x8xf32>
    %107 = arith.mulf %105, %106 : vector<1x8x8xf32>
    %108 = arith.truncf %107 : vector<1x8x8xf32> to vector<1x8x8xbf16>
    %c0_43 = arith.constant 0 : index
    %c0_44 = arith.constant 0 : index
    %c24 = arith.constant 24 : index
    %109 = vector.load %arg13[%c0_43, %c0_44, %c24] : memref<1x8x32xbf16, #tpu.memory_space<vmem>>, vector<1x8x8xbf16>
    tpu.vector_store %arg13[%c0_43, %c0_44, %c24], %108 {strides = array<i32>} : memref<1x8x32xbf16, #tpu.memory_space<vmem>>, vector<1x8x8xbf16>,
    %c0_45 = arith.constant 0 : index
    %c0_46 = arith.constant 0 : index
    %c0_47 = arith.constant 0 : index
    %110 = vector.load %arg13[%c0_45, %c0_46, %c0_47] : memref<1x8x32xbf16, #tpu.memory_space<vmem>>, vector<1x8x32xbf16>
    %111 = vector.shape_cast %110 : vector<1x8x32xbf16> to vector<8x32xbf16>
    %c0_48 = arith.constant 0 : index
    %c0_49 = arith.constant 0 : index
    %112 = vector.load %arg7[%c0_48, %c0_49] : memref<32x32xbf16, #tpu.memory_space<vmem>>, vector<32x32xbf16>
    %cst_50 = arith.constant dense<0.000000e+00> : vector<8x32xf32>
    %113 = tpu.matmul %111, %112, %cst_50 {dimension_numbers = #tpu.dot_dimension_numbers<[1], [0], [0], [1], [0, 0, 1, 1], [], []>} : vector<8x32xbf16>, vector<32x32xbf16>, vector<8x32xf32> -> vector<8x32xf32>
    %114 = vector.broadcast %4 : vector<1x32xf32> to vector<8x32xf32>
    %115 = arith.addf %113, %114 : vector<8x32xf32>
    %cst_51 = arith.constant 2.000000e+00 : f32
    %116 = vector.broadcast %cst_51 : f32 to vector<8x32xf32>
    %117 = arith.mulf %116, %12 : vector<8x32xf32>
    %118 = arith.addf %117, %115 : vector<8x32xf32>
    %cst_52 = arith.constant dense<0.000000e+00> : vector<8xf32>
    %119 = vector.multi_reduction <add>, %118, %cst_52 [1] : vector<8x32xf32> to vector<8xf32>
    %120 = vector.shape_cast %119 : vector<8xf32> to vector<8x1xf32>
    %cst_53 = arith.constant 3.200000e+01 : f32
    %121 = vector.broadcast %cst_53 : f32 to vector<8x1xf32>
    %122 = arith.divf %120, %121 : vector<8x1xf32>
    %123 = vector.broadcast %122 : vector<8x1xf32> to vector<8x32xf32>
    %124 = arith.subf %118, %123 : vector<8x32xf32>
    %125 = arith.mulf %124, %124 : vector<8x32xf32>
    %cst_54 = arith.constant dense<0.000000e+00> : vector<8xf32>
    %126 = vector.multi_reduction <add>, %125, %cst_54 [1] : vector<8x32xf32> to vector<8xf32>
    %127 = vector.shape_cast %126 : vector<8xf32> to vector<8x1xf32>
    %cst_55 = arith.constant 3.200000e+01 : f32
    %128 = vector.broadcast %cst_55 : f32 to vector<8x1xf32>
    %129 = arith.divf %127, %128 : vector<8x1xf32>
    %130 = vector.broadcast %122 : vector<8x1xf32> to vector<8x32xf32>
    %131 = arith.subf %118, %130 : vector<8x32xf32>
    %cst_56 = arith.constant 9.99999974E-6 : f32
    %132 = vector.broadcast %cst_56 : f32 to vector<8x1xf32>
    %133 = arith.addf %129, %132 : vector<8x1xf32>
    %134 = math.rsqrt %133 : vector<8x1xf32>
    %135 = vector.broadcast %134 : vector<8x1xf32> to vector<8x32xf32>
    %136 = arith.mulf %131, %135 : vector<8x32xf32>
    %137 = vector.broadcast %5 : vector<1x32xf32> to vector<8x32xf32>
    %138 = arith.mulf %136, %137 : vector<8x32xf32>
    %139 = vector.broadcast %6 : vector<1x32xf32> to vector<8x32xf32>
    %140 = arith.addf %138, %139 : vector<8x32xf32>
    %141 = arith.truncf %140 : vector<8x32xf32> to vector<8x32xbf16>
    %c0_57 = arith.constant 0 : index
    %c0_58 = arith.constant 0 : index
    %142 = vector.load %arg8[%c0_57, %c0_58] : memref<32x128xbf16, #tpu.memory_space<vmem>>, vector<32x128xbf16>
    %cst_59 = arith.constant dense<0.000000e+00> : vector<8x128xf32>
    %143 = tpu.matmul %141, %142, %cst_59 {dimension_numbers = #tpu.dot_dimension_numbers<[1], [0], [0], [1], [0, 0, 1, 1], [], []>} : vector<8x32xbf16>, vector<32x128xbf16>, vector<8x128xf32> -> vector<8x128xf32>
    %144 = vector.broadcast %10 : vector<1x128xf32> to vector<8x128xf32>
    %145 = arith.addf %143, %144 : vector<8x128xf32>
    %cst_60 = arith.constant 0.000000e+00 : f32
    %146 = vector.broadcast %cst_60 : f32 to vector<8x128xf32>
    %147 = arith.maximumf %145, %146 : vector<8x128xf32>
    %148 = arith.truncf %147 : vector<8x128xf32> to vector<8x128xbf16>
    %c0_61 = arith.constant 0 : index
    %c0_62 = arith.constant 0 : index
    %149 = vector.load %arg9[%c0_61, %c0_62] : memref<128x32xbf16, #tpu.memory_space<vmem>>, vector<128x32xbf16>
    %cst_63 = arith.constant dense<0.000000e+00> : vector<8x32xf32>
    %150 = tpu.matmul %148, %149, %cst_63 {dimension_numbers = #tpu.dot_dimension_numbers<[1], [0], [0], [1], [0, 0, 1, 1], [], []>} : vector<8x128xbf16>, vector<128x32xbf16>, vector<8x32xf32> -> vector<8x32xf32>
    %151 = vector.broadcast %7 : vector<1x32xf32> to vector<8x32xf32>
    %152 = arith.addf %150, %151 : vector<8x32xf32>
    %cst_64 = arith.constant 2.000000e+00 : f32
    %153 = vector.broadcast %cst_64 : f32 to vector<8x32xf32>
    %154 = arith.mulf %153, %140 : vector<8x32xf32>
    %155 = arith.addf %154, %152 : vector<8x32xf32>
    %cst_65 = arith.constant dense<0.000000e+00> : vector<8xf32>
    %156 = vector.multi_reduction <add>, %155, %cst_65 [1] : vector<8x32xf32> to vector<8xf32>
    %157 = vector.shape_cast %156 : vector<8xf32> to vector<8x1xf32>
    %cst_66 = arith.constant 3.200000e+01 : f32
    %158 = vector.broadcast %cst_66 : f32 to vector<8x1xf32>
    %159 = arith.divf %157, %158 : vector<8x1xf32>
    %160 = vector.broadcast %159 : vector<8x1xf32> to vector<8x32xf32>
    %161 = arith.subf %155, %160 : vector<8x32xf32>
    %162 = arith.mulf %161, %161 : vector<8x32xf32>
    %cst_67 = arith.constant dense<0.000000e+00> : vector<8xf32>
    %163 = vector.multi_reduction <add>, %162, %cst_67 [1] : vector<8x32xf32> to vector<8xf32>
    %164 = vector.shape_cast %163 : vector<8xf32> to vector<8x1xf32>
    %cst_68 = arith.constant 3.200000e+01 : f32
    %165 = vector.broadcast %cst_68 : f32 to vector<8x1xf32>
    %166 = arith.divf %164, %165 : vector<8x1xf32>
    %167 = vector.broadcast %159 : vector<8x1xf32> to vector<8x32xf32>
    %168 = arith.subf %155, %167 : vector<8x32xf32>
    %cst_69 = arith.constant 9.99999974E-6 : f32
    %169 = vector.broadcast %cst_69 : f32 to vector<8x1xf32>
    %170 = arith.addf %166, %169 : vector<8x1xf32>
    %171 = math.rsqrt %170 : vector<8x1xf32>
    %172 = vector.broadcast %171 : vector<8x1xf32> to vector<8x32xf32>
    %173 = arith.mulf %168, %172 : vector<8x32xf32>
    %174 = vector.broadcast %8 : vector<1x32xf32> to vector<8x32xf32>
    %175 = arith.mulf %173, %174 : vector<8x32xf32>
    %176 = vector.broadcast %9 : vector<1x32xf32> to vector<8x32xf32>
    %177 = arith.addf %175, %176 : vector<8x32xf32>
    %178 = vector.shape_cast %177 : vector<8x32xf32> to vector<1x8x32xf32>
    %c0_70 = arith.constant 0 : index
    %c0_71 = arith.constant 0 : index
    %c0_72 = arith.constant 0 : index
    %179 = vector.load %arg12[%c0_70, %c0_71, %c0_72] : memref<1x8x32xf32, #tpu.memory_space<vmem>>, vector<1x8x32xf32>
    tpu.vector_store %arg12[%c0_70, %c0_71, %c0_72], %178 {strides = array<i32>} : memref<1x8x32xf32, #tpu.memory_space<vmem>>, vector<1x8x32xf32>,
    return
  }
  func.func @transform_0(%arg0: i32) -> (i32, i32, i32) {
    %c0_i32 = arith.constant 0 : i32
    %c0_i32_0 = arith.constant 0 : i32
    %c0_i32_1 = arith.constant 0 : i32
    return %arg0, %c0_i32, %c0_i32_0 : i32, i32, i32
  }
  func.func @transform_1(%arg0: i32) -> (i32, i32, i32) {
    %c0_i32 = arith.constant 0 : i32
    %c0_i32_0 = arith.constant 0 : i32
    %c0_i32_1 = arith.constant 0 : i32
    return %arg0, %c0_i32, %c0_i32_0 : i32, i32, i32
  }
  func.func @transform_2(%arg0: i32) -> (i32, i32, i32) {
    %c0_i32 = arith.constant 0 : i32
    %c0_i32_0 = arith.constant 0 : i32
    %c0_i32_1 = arith.constant 0 : i32
    return %arg0, %c0_i32, %c0_i32_0 : i32, i32, i32
  }
  func.func @transform_3(%arg0: i32) -> (i32, i32) {
    %c0_i32 = arith.constant 0 : i32
    %c0_i32_0 = arith.constant 0 : i32
    %c0_i32_1 = arith.constant 0 : i32
    return %c0_i32, %c0_i32_0 : i32, i32
  }
  func.func @transform_4(%arg0: i32) -> (i32, i32) {
    %c0_i32 = arith.constant 0 : i32
    %c0_i32_0 = arith.constant 0 : i32
    %c0_i32_1 = arith.constant 0 : i32
    return %c0_i32, %c0_i32_0 : i32, i32
  }
  func.func @transform_5(%arg0: i32) -> (i32, i32) {
    %c0_i32 = arith.constant 0 : i32
    %c0_i32_0 = arith.constant 0 : i32
    %c0_i32_1 = arith.constant 0 : i32
    return %c0_i32, %c0_i32_0 : i32, i32
  }
  func.func @transform_6(%arg0: i32) -> (i32, i32) {
    %c0_i32 = arith.constant 0 : i32
    %c0_i32_0 = arith.constant 0 : i32
    %c0_i32_1 = arith.constant 0 : i32
    return %c0_i32, %c0_i32_0 : i32, i32
  }
  func.func @transform_7(%arg0: i32) -> (i32, i32) {
    %c0_i32 = arith.constant 0 : i32
    %c0_i32_0 = arith.constant 0 : i32
    %c0_i32_1 = arith.constant 0 : i32
    return %c0_i32, %c0_i32_0 : i32, i32
  }
  func.func @transform_8(%arg0: i32) -> (i32, i32) {
    %c0_i32 = arith.constant 0 : i32
    %c0_i32_0 = arith.constant 0 : i32
    %c0_i32_1 = arith.constant 0 : i32
    return %c0_i32, %c0_i32_0 : i32, i32
  }
  func.func @transform_9(%arg0: i32) -> (i32, i32) {
    %c0_i32 = arith.constant 0 : i32
    %c0_i32_0 = arith.constant 0 : i32
    %c0_i32_1 = arith.constant 0 : i32
    return %c0_i32, %c0_i32_0 : i32, i32
  }
  func.func @transform_10(%arg0: i32) -> (i32, i32) {
    %c0_i32 = arith.constant 0 : i32
    %c0_i32_0 = arith.constant 0 : i32
    %c0_i32_1 = arith.constant 0 : i32
    return %c0_i32, %c0_i32_0 : i32, i32
  }
  func.func @transform_11(%arg0: i32) -> (i32, i32, i32) {
    %c0_i32 = arith.constant 0 : i32
    %c0_i32_0 = arith.constant 0 : i32
    %c0_i32_1 = arith.constant 0 : i32
    return %arg0, %c0_i32, %c0_i32_0 : i32, i32, i32
  }
}

</mosaic_0001>

<llo_original>
// kernel: tpu_custom_call.1
$region0: #{tpu_custom_call.1}
  #allocation0 [shape = 'u32[]', space=smem, size = 0x4, offset = 0x4, fixed_abs, tag = 'smem constant byte address 0x4 - core index']
  #allocation1 [shape = 'u32[144,128]{1,0:T(1,128)}', space=vmem, size = 0x12000, scoped, tag = 'internal scratch']
  #allocation2 [shape = 'bf16[1,8,32]{2,1,0:T(8,128)(2,1)}', space=vmem, size = 0x800, scoped, tag = 'scratch operand']
  %s0 = inlined_call_operand.vmem [shape: f32[2,8,32], index: 0, kind: input, shape index: {}]
  %s1 = inlined_call_operand.vmem [shape: f32[2,8,32], index: 1, kind: input, shape index: {}]
  %s2 = inlined_call_operand.vmem [shape: f32[2,8,32], index: 2, kind: input, shape index: {}]
  %s3 = inlined_call_operand.vmem [shape: bf16[32,32], index: 3, kind: input, shape index: {}]
  %s4 = inlined_call_operand.vmem [shape: bf16[32,32], index: 4, kind: input, shape index: {}]
  %s5 = inlined_call_operand.hbm [shape: bf16[32,32], index: 5, kind: input, shape index: {}]
  %s6 = inlined_call_operand.hbm [shape: bf16[32,32], index: 6, kind: input, shape index: {}]
  %s7 = inlined_call_operand.hbm [shape: bf16[32,128], index: 7, kind: input, shape index: {}]
  %s8 = inlined_call_operand.vmem [shape: bf16[128,32], index: 8, kind: input, shape index: {}]
  %s9 = inlined_call_operand.vmem [shape: f32[16,32], index: 9, kind: input, shape index: {}]
  %s10 = inlined_call_operand.vmem [shape: f32[1,128], index: 10, kind: input, shape index: {}]
  %s11 = inlined_call_operand.hbm [shape: f32[2,8,32], index: 11, kind: output, shape index: {}]
  %s12 = sld [smem:[#allocation0]]
  $region89: #{tpu_custom_call.1} parent=0
    _
  %s14 = ssub.s32 1, %s12
  %s15 = scalar_select 0, %s14, %s12
  $region1: #{tpu_custom_call.1} parent=0
    #allocation3 [shape = 'u8[8192]{0}', space=vmem, size = 0x2000, scoped, tag = 'input window, operand 5, single buffered']
    #allocation4 [shape = 's32[2]{0}', space=sflag, size = 0x8, scoped, tag = 'scoped memory for tpu_custom_call.1']
    #allocation5 [shape = 's32[2]{0}', space=sflag, size = 0x8, scoped, tag = 'scoped memory for tpu_custom_call.1']
    #allocation6 [shape = 'u8[8192]{0}', space=vmem, size = 0x2000, scoped, tag = 'input window, operand 6, single buffered']
    #allocation7 [shape = 's32[1]{0}', space=sflag, size = 0x4, scoped, tag = 'scoped memory for tpu_custom_call.1']
    #allocation8 [shape = 'u8[8192]{0}', space=vmem, size = 0x2000, scoped, tag = 'input window, operand 7, single buffered']
    #allocation9 [shape = 'u8[8192]{0}', space=vmem, size = 0x2000, scoped, tag = 'output window, operand 0']
    %16 = vsyncpa [#allocation4], 0
    %17 = vsyncpa [#allocation7], 0
    %18 = vsyncpa [#allocation5], 0
    %s19 = scalar_lea.sflag [#allocation5], 1
    %20 = vsyncpa %s19, 0
    loop: start=0, step=1, limit=4
    $region2: #{tpu_custom_call.1} parent=1 // loop_pre_header
      _
    $region3: #{tpu_custom_call.1} parent=1 // loop_header
      %s22 = sphi 0, %s26
      %p23 = scmp.ge.s32.totalorder %s22, 4
      %s32 = sphi 0, %s34
      %s35 = sphi 0, %s32
      %s36 = sphi 0, %s35
      %s52 = sphi 0, %s36
      %s58 = sphi 0, %s60
      %s61 = sphi 0, %s58
      %s62 = sphi 0, %s61
      %s78 = sphi 0, %s62
      %s84 = sphi 0, %s86
      %s87 = sphi 0, %s84
      %s88 = sphi 0, %s87
      %s104 = sphi 0, %s88
      %s108 = sphi 0, %s108
      %s110 = sphi 0, %s108
      %s111 = sphi 0, %s110
      %s125 = sphi 0, %s111
      %s129 = sphi 0, %s129
      %s131 = sphi 0, %s129
      %s132 = sphi 0, %s131
      %s146 = sphi 0, %s132
      %s150 = sphi 0, %s150
      %s152 = sphi 0, %s150
      %s153 = sphi 0, %s152
      %s167 = sphi 0, %s153
      %s171 = sphi 0, %s171
      %s173 = sphi 0, %s171
      %s174 = sphi 0, %s173
      %s188 = sphi 0, %s174
      %s192 = sphi 0, %s192
      %s194 = sphi 0, %s192
      %s195 = sphi 0, %s194
      %s209 = sphi 0, %s195
      %s213 = sphi 0, %s213
      %s215 = sphi 0, %s213
      %s216 = sphi 0, %s215
      %s230 = sphi 0, %s216
      %s234 = sphi 0, %s234
      %s236 = sphi 0, %s234
      %s237 = sphi 0, %s236
      %s251 = sphi 0, %s237
      %s255 = sphi 0, %s255
      %s257 = sphi 0, %s255
      %s258 = sphi 0, %s257
      %s272 = sphi 0, %s258
      %s278 = sphi 0, %s280
      %s281 = sphi 0, %s278
      %s282 = sphi 0, %s281
      %s298 = sphi 0, %s282
    $region4: #{tpu_custom_call.1} parent=1 // loop_header_branch
      %25 = sbr.rel (%p23) target = $region8
    $region5: #{tpu_custom_call.1} parent=1 // loop_body
      %s27 = ssub.s32 %s22, 1
      %s28 = ssub.s32 %s22, 2
      %s29 = sadd.s32 %s22, 1
      %s30 = ssub.s32 %s22, %s29
      %p31 = scmp.eq.s32.totalorder %s30, 0
      %s33 = sadd.s32 %s32, 1
      %s34 = scalar_select %p31, %s32, %s33
      %p37 = pneg %p31
      %p38 = scmp.eq.s32.totalorder %s22, 1
      %p39 = por %p37, %p38
      %p40 = scmp.ne.s32.totalorder %s32, %s35
      %p41 = scmp.eq.s32.totalorder %s22, 0
      %p42 = por %p40, %p41
      %p43 = scmp.ne.s32.totalorder %s32, %s35
      %p44 = scmp.eq.s32.totalorder %s27, 1
      %p45 = por %p43, %p44
      %p46 = scmp.ne.s32.totalorder %s35, %s36
      %p47 = scmp.eq.s32.totalorder %s27, 0
      %p48 = por %p46, %p47
      %p49 = scmp.ne.s32.totalorder %s35, %s36
      %p50 = scmp.eq.s32.totalorder %s28, 1
      %p51 = por %p49, %p50
      %p53 = scmp.ne.s32.totalorder %s36, %s52
      %p54 = scmp.eq.s32.totalorder %s28, 0
      %p55 = por %p53, %p54
      %s56 = ssub.s32 %s22, %s29
      %p57 = scmp.eq.s32.totalorder %s56, 0
      %s59 = sadd.s32 %s58, 1
      %s60 = scalar_select %p57, %s58, %s59
      %p63 = pneg %p57
      %p64 = scmp.eq.s32.totalorder %s22, 1
      %p65 = por %p63, %p64
      %p66 = scmp.ne.s32.totalorder %s58, %s61
      %p67 = scmp.eq.s32.totalorder %s22, 0
      %p68 = por %p66, %p67
      %p69 = scmp.ne.s32.totalorder %s58, %s61
      %p70 = scmp.eq.s32.totalorder %s27, 1
      %p71 = por %p69, %p70
      %p72 = scmp.ne.s32.totalorder %s61, %s62
      %p73 = scmp.eq.s32.totalorder %s27, 0
      %p74 = por %p72, %p73
      %p75 = scmp.ne.s32.totalorder %s61, %s62
      %p76 = scmp.eq.s32.totalorder %s28, 1
      %p77 = por %p75, %p76
      %p79 = scmp.ne.s32.totalorder %s62, %s78
      %p80 = scmp.eq.s32.totalorder %s28, 0
      %p81 = por %p79, %p80
      %s82 = ssub.s32 %s22, %s29
      %p83 = scmp.eq.s32.totalorder %s82, 0
      %s85 = sadd.s32 %s84, 1
      %s86 = scalar_select %p83, %s84, %s85
      %p89 = pneg %p83
      %p90 = scmp.eq.s32.totalorder %s22, 1
      %p91 = por %p89, %p90
      %p92 = scmp.ne.s32.totalorder %s84, %s87
      %p93 = scmp.eq.s32.totalorder %s22, 0
      %p94 = por %p92, %p93
      %p95 = scmp.ne.s32.totalorder %s84, %s87
      %p96 = scmp.eq.s32.totalorder %s27, 1
      %p97 = por %p95, %p96
      %p98 = scmp.ne.s32.totalorder %s87, %s88
      %p99 = scmp.eq.s32.totalorder %s27, 0
      %p100 = por %p98, %p99
      %p101 = scmp.ne.s32.totalorder %s87, %s88
      %p102 = scmp.eq.s32.totalorder %s28, 1
      %p103 = por %p101, %p102
      %p105 = scmp.ne.s32.totalorder %s88, %s104
      %p106 = scmp.eq.s32.totalorder %s28, 0
      %p107 = por %p105, %p106
      %s109 = sadd.s32 %s108, 1
      %p112 = scmp.eq.s32.totalorder %s22, 1
      %p113 = scmp.ne.s32.totalorder %s108, %s110
      %p114 = scmp.eq.s32.totalorder %s22, 0
      %p115 = por %p113, %p114
      %p116 = scmp.ne.s32.totalorder %s108, %s110
      %p117 = scmp.eq.s32.totalorder %s27, 1
      %p118 = por %p116, %p117
      %p119 = scmp.ne.s32.totalorder %s110, %s111
      %p120 = scmp.eq.s32.totalorder %s27, 0
      %p121 = por %p119, %p120
      %p122 = scmp.ne.s32.totalorder %s110, %s111
      %p123 = scmp.eq.s32.totalorder %s28, 1
      %p124 = por %p122, %p123
      %p126 = scmp.ne.s32.totalorder %s111, %s125
      %p127 = scmp.eq.s32.totalorder %s28, 0
      %p128 = por %p126, %p127
      %s130 = sadd.s32 %s129, 1
      %p133 = scmp.eq.s32.totalorder %s22, 1
      %p134 = scmp.ne.s32.totalorder %s129, %s131
      %p135 = scmp.eq.s32.totalorder %s22, 0
      %p136 = por %p134, %p135
      %p137 = scmp.ne.s32.totalorder %s129, %s131
      %p138 = scmp.eq.s32.totalorder %s27, 1
      %p139 = por %p137, %p138
      %p140 = scmp.ne.s32.totalorder %s131, %s132
      %p141 = scmp.eq.s32.totalorder %s27, 0
      %p142 = por %p140, %p141
      %p143 = scmp.ne.s32.totalorder %s131, %s132
      %p144 = scmp.eq.s32.totalorder %s28, 1
      %p145 = por %p143, %p144
      %p147 = scmp.ne.s32.totalorder %s132, %s146
      %p148 = scmp.eq.s32.totalorder %s28, 0
      %p149 = por %p147, %p148
      %s151 = sadd.s32 %s150, 1
      %p154 = scmp.eq.s32.totalorder %s22, 1
      %p155 = scmp.ne.s32.totalorder %s150, %s152
      %p156 = scmp.eq.s32.totalorder %s22, 0
      %p157 = por %p155, %p156
      %p158 = scmp.ne.s32.totalorder %s150, %s152
      %p159 = scmp.eq.s32.totalorder %s27, 1
      %p160 = por %p158, %p159
      %p161 = scmp.ne.s32.totalorder %s152, %s153
      %p162 = scmp.eq.s32.totalorder %s27, 0
      %p163 = por %p161, %p162
      %p164 = scmp.ne.s32.totalorder %s152, %s153
      %p165 = scmp.eq.s32.totalorder %s28, 1
      %p166 = por %p164, %p165
      %p168 = scmp.ne.s32.totalorder %s153, %s167
      %p169 = scmp.eq.s32.totalorder %s28, 0
      %p170 = por %p168, %p169
      %s172 = sadd.s32 %s171, 1
      %p175 = scmp.eq.s32.totalorder %s22, 1
      %p176 = scmp.ne.s32.totalorder %s171, %s173
      %p177 = scmp.eq.s32.totalorder %s22, 0
      %p178 = por %p176, %p177
      %p179 = scmp.ne.s32.totalorder %s171, %s173
      %p180 = scmp.eq.s32.totalorder %s27, 1
      %p181 = por %p179, %p180
      %p182 = scmp.ne.s32.totalorder %s173, %s174
      %p183 = scmp.eq.s32.totalorder %s27, 0
      %p184 = por %p182, %p183
      %p185 = scmp.ne.s32.totalorder %s173, %s174
      %p186 = scmp.eq.s32.totalorder %s28, 1
      %p187 = por %p185, %p186
      %p189 = scmp.ne.s32.totalorder %s174, %s188
      %p190 = scmp.eq.s32.totalorder %s28, 0
      %p191 = por %p189, %p190
      %s193 = sadd.s32 %s192, 1
      %p196 = scmp.eq.s32.totalorder %s22, 1
      %p197 = scmp.ne.s32.totalorder %s192, %s194
      %p198 = scmp.eq.s32.totalorder %s22, 0
      %p199 = por %p197, %p198
      %p200 = scmp.ne.s32.totalorder %s192, %s194
      %p201 = scmp.eq.s32.totalorder %s27, 1
      %p202 = por %p200, %p201
      %p203 = scmp.ne.s32.totalorder %s194, %s195
      %p204 = scmp.eq.s32.totalorder %s27, 0
      %p205 = por %p203, %p204
      %p206 = scmp.ne.s32.totalorder %s194, %s195
      %p207 = scmp.eq.s32.totalorder %s28, 1
      %p208 = por %p206, %p207
      %p210 = scmp.ne.s32.totalorder %s195, %s209
      %p211 = scmp.eq.s32.totalorder %s28, 0
      %p212 = por %p210, %p211
      %s214 = sadd.s32 %s213, 1
      %p217 = scmp.eq.s32.totalorder %s22, 1
      %p218 = scmp.ne.s32.totalorder %s213, %s215
      %p219 = scmp.eq.s32.totalorder %s22, 0
      %p220 = por %p218, %p219
      %p221 = scmp.ne.s32.totalorder %s213, %s215
      %p222 = scmp.eq.s32.totalorder %s27, 1
      %p223 = por %p221, %p222
      %p224 = scmp.ne.s32.totalorder %s215, %s216
      %p225 = scmp.eq.s32.totalorder %s27, 0
      %p226 = por %p224, %p225
      %p227 = scmp.ne.s32.totalorder %s215, %s216
      %p228 = scmp.eq.s32.totalorder %s28, 1
      %p229 = por %p227, %p228
      %p231 = scmp.ne.s32.totalorder %s216, %s230
      %p232 = scmp.eq.s32.totalorder %s28, 0
      %p233 = por %p231, %p232
      %s235 = sadd.s32 %s234, 1
      %p238 = scmp.eq.s32.totalorder %s22, 1
      %p239 = scmp.ne.s32.totalorder %s234, %s236
      %p240 = scmp.eq.s32.totalorder %s22, 0
      %p241 = por %p239, %p240
      %p242 = scmp.ne.s32.totalorder %s234, %s236
      %p243 = scmp.eq.s32.totalorder %s27, 1
      %p244 = por %p242, %p243
      %p245 = scmp.ne.s32.totalorder %s236, %s237
      %p246 = scmp.eq.s32.totalorder %s27, 0
      %p247 = por %p245, %p246
      %p248 = scmp.ne.s32.totalorder %s236, %s237
      %p249 = scmp.eq.s32.totalorder %s28, 1
      %p250 = por %p248, %p249
      %p252 = scmp.ne.s32.totalorder %s237, %s251
      %p253 = scmp.eq.s32.totalorder %s28, 0
      %p254 = por %p252, %p253
      %s256 = sadd.s32 %s255, 1
      %p259 = scmp.eq.s32.totalorder %s22, 1
      %p260 = scmp.ne.s32.totalorder %s255, %s257
      %p261 = scmp.eq.s32.totalorder %s22, 0
      %p262 = por %p260, %p261
      %p263 = scmp.ne.s32.totalorder %s255, %s257
      %p264 = scmp.eq.s32.totalorder %s27, 1
      %p265 = por %p263, %p264
      %p266 = scmp.ne.s32.totalorder %s257, %s258
      %p267 = scmp.eq.s32.totalorder %s27, 0
      %p268 = por %p266, %p267
      %p269 = scmp.ne.s32.totalorder %s257, %s258
      %p270 = scmp.eq.s32.totalorder %s28, 1
      %p271 = por %p269, %p270
      %p273 = scmp.ne.s32.totalorder %s258, %s272
      %p274 = scmp.eq.s32.totalorder %s28, 0
      %p275 = por %p273, %p274
      %s276 = ssub.s32 %s22, %s29
      %p277 = scmp.eq.s32.totalorder %s276, 0
      %s279 = sadd.s32 %s278, 1
      %s280 = scalar_select %p277, %s278, %s279
      %p283 = pneg %p277
      %p284 = scmp.eq.s32.totalorder %s22, 1
      %p285 = por %p283, %p284
      %p286 = scmp.ne.s32.totalorder %s278, %s281
      %p287 = scmp.eq.s32.totalorder %s22, 0
      %p288 = por %p286, %p287
      %p289 = scmp.ne.s32.totalorder %s278, %s281
      %p290 = scmp.eq.s32.totalorder %s27, 1
      %p291 = por %p289, %p290
      %p292 = scmp.ne.s32.totalorder %s281, %s282
      %p293 = scmp.eq.s32.totalorder %s27, 0
      %p294 = por %p292, %p293
      %p295 = scmp.ne.s32.totalorder %s281, %s282
      %p296 = scmp.eq.s32.totalorder %s28, 1
      %p297 = por %p295, %p296
      %p299 = scmp.ne.s32.totalorder %s282, %s298
      %p300 = scmp.eq.s32.totalorder %s28, 0
      %p301 = por %p299, %p300
      %p302 = scmp.le.s32.totalorder 1, %s22
      %p303 = scmp.lt.s32.totalorder %s22, 3
      %p304 = pnand %p302, %p303
      %p305 = pneg %p304
      // Predicated region
      $region9: #{tpu_custom_call.1} parent=5 // pred_check
        _
      $region10: #{tpu_custom_call.1} parent=5 // pred_check_branch
        %307 = sbr.rel (%p304) target = $region12
      $region11: #{tpu_custom_call.1} parent=5 // pred_region
        %s308 = ssub.s32 %s22, 1
        // Predicated region
        $region13: #{tpu_custom_call.1} parent=11 // pred_check
          %p309 = pneg %p121
        $region14: #{tpu_custom_call.1} parent=11 // pred_check_branch
          %311 = sbr.rel (%p309) target = $region16
        $region15: #{tpu_custom_call.1} parent=11 // pred_region
          _
        $region16: #{tpu_custom_call.1} parent=11 // pred_fallthru
          _
        // Predicated region
        $region17: #{tpu_custom_call.1} parent=11 // pred_check
          %p312 = pneg %p142
        $region18: #{tpu_custom_call.1} parent=11 // pred_check_branch
          %314 = sbr.rel (%p312) target = $region20
        $region19: #{tpu_custom_call.1} parent=11 // pred_region
          _
        $region20: #{tpu_custom_call.1} parent=11 // pred_fallthru
          _
        // Predicated region
        $region21: #{tpu_custom_call.1} parent=11 // pred_check
          %p315 = pneg %p163
        $region22: #{tpu_custom_call.1} parent=11 // pred_check_branch
          %317 = sbr.rel (%p315) target = $region24
        $region23: #{tpu_custom_call.1} parent=11 // pred_region
          %s319 = ssub.s32 256, 256
          %320 = vsyncadd [#allocation4], %s319
          %s321 = sshll.u32 [#allocation3], 4
          %s322 = int_to_ptr.vmem [resolvable:$true] %s321
          %327 = dma.hbm_to_vmem [thread:$0]  %s5, 256, %s322, [#allocation4], 64, 64, 4
        $region24: #{tpu_custom_call.1} parent=11 // pred_fallthru
          _
        // Predicated region
        $region25: #{tpu_custom_call.1} parent=11 // pred_check
          %p328 = pneg %p184
        $region26: #{tpu_custom_call.1} parent=11 // pred_check_branch
          %330 = sbr.rel (%p328) target = $region28
        $region27: #{tpu_custom_call.1} parent=11 // pred_region
          %s332 = ssub.s32 256, 256
          %333 = vsyncadd [#allocation7], %s332
          %s334 = sshll.u32 [#allocation6], 4
          %s335 = int_to_ptr.vmem [resolvable:$true] %s334
          %340 = dma.hbm_to_vmem [thread:$0]  %s6, 256, %s335, [#allocation7], 64, 64, 4
        $region28: #{tpu_custom_call.1} parent=11 // pred_fallthru
          _
        // Predicated region
        $region29: #{tpu_custom_call.1} parent=11 // pred_check
          %p341 = pneg %p205
        $region30: #{tpu_custom_call.1} parent=11 // pred_check_branch
          %343 = sbr.rel (%p341) target = $region32
        $region31: #{tpu_custom_call.1} parent=11 // pred_region
          %s345 = ssub.s32 256, 256
          %346 = vsyncadd [#allocation7], %s345
          %s347 = sshll.u32 [#allocation8], 4
          %s348 = int_to_ptr.vmem [resolvable:$true] %s347
          %353 = dma.hbm_to_vmem [thread:$0]  %s7, 256, %s348, [#allocation7], 64, 64, 4
        $region32: #{tpu_custom_call.1} parent=11 // pred_fallthru
          _
        // Predicated region
        $region33: #{tpu_custom_call.1} parent=11 // pred_check
          %p354 = pneg %p226
        $region34: #{tpu_custom_call.1} parent=11 // pred_check_branch
          %356 = sbr.rel (%p354) target = $region36
        $region35: #{tpu_custom_call.1} parent=11 // pred_region
          _
        $region36: #{tpu_custom_call.1} parent=11 // pred_fallthru
          _
        // Predicated region
        $region37: #{tpu_custom_call.1} parent=11 // pred_check
          %p357 = pneg %p247
        $region38: #{tpu_custom_call.1} parent=11 // pred_check_branch
          %359 = sbr.rel (%p357) target = $region40
        $region39: #{tpu_custom_call.1} parent=11 // pred_region
          _
        $region40: #{tpu_custom_call.1} parent=11 // pred_fallthru
          _
        // Predicated region
        $region41: #{tpu_custom_call.1} parent=11 // pred_check
          %p360 = pneg %p268
        $region42: #{tpu_custom_call.1} parent=11 // pred_check_branch
          %362 = sbr.rel (%p360) target = $region44
        $region43: #{tpu_custom_call.1} parent=11 // pred_region
          _
        $region44: #{tpu_custom_call.1} parent=11 // pred_fallthru
          _
      $region12: #{tpu_custom_call.1} parent=5 // pred_fallthru
        _
      %p363 = scmp.lt.s32.totalorder %s22, 2
      // Predicated region
      $region45: #{tpu_custom_call.1} parent=5 // pred_check
        %p364 = pneg %p363
      $region46: #{tpu_custom_call.1} parent=5 // pred_check_branch
        %366 = sbr.rel (%p364) target = $region48
      $region47: #{tpu_custom_call.1} parent=5 // pred_region
        // Predicated region
        $region49: #{tpu_custom_call.1} parent=47 // pred_check
          %p367 = pneg %p42
        $region50: #{tpu_custom_call.1} parent=47 // pred_check_branch
          %369 = sbr.rel (%p367) target = $region52
        $region51: #{tpu_custom_call.1} parent=47 // pred_region
          %p370 = scmp.lt.s32.totalorder %s22, 1
          %s371 = scalar_select %p370, %s22, 1
          %s372 = smul.addr %s371, 8
          %s373 = scalar_lea.vmem %s0, %s372
        $region52: #{tpu_custom_call.1} parent=47 // pred_fallthru
          _
        // Predicated region
        $region53: #{tpu_custom_call.1} parent=47 // pred_check
          %p374 = pneg %p68
        $region54: #{tpu_custom_call.1} parent=47 // pred_check_branch
          %376 = sbr.rel (%p374) target = $region56
        $region55: #{tpu_custom_call.1} parent=47 // pred_region
          %p377 = scmp.lt.s32.totalorder %s22, 1
          %s378 = scalar_select %p377, %s22, 1
          %s379 = smul.addr %s378, 8
          %s380 = scalar_lea.vmem %s1, %s379
        $region56: #{tpu_custom_call.1} parent=47 // pred_fallthru
          _
        // Predicated region
        $region57: #{tpu_custom_call.1} parent=47 // pred_check
          %p381 = pneg %p94
        $region58: #{tpu_custom_call.1} parent=47 // pred_check_branch
          %383 = sbr.rel (%p381) target = $region60
        $region59: #{tpu_custom_call.1} parent=47 // pred_region
          %p384 = scmp.lt.s32.totalorder %s22, 1
          %s385 = scalar_select %p384, %s22, 1
          %s386 = smul.addr %s385, 8
          %s387 = scalar_lea.vmem %s2, %s386
        $region60: #{tpu_custom_call.1} parent=47 // pred_fallthru
          _
      $region48: #{tpu_custom_call.1} parent=5 // pred_fallthru
        _
      %p388 = scmp.le.s32.totalorder 1, %s22
      %p389 = scmp.lt.s32.totalorder %s22, 3
      %p390 = pnand %p388, %p389
      %p391 = pneg %p390
      // Predicated region
      $region61: #{tpu_custom_call.1} parent=5 // pred_check
        _
      $region62: #{tpu_custom_call.1} parent=5 // pred_check_branch
        %393 = sbr.rel (%p390) target = $region64
      $region63: #{tpu_custom_call.1} parent=5 // pred_region
        %s394 = ssub.s32 %s22, 1
        // Predicated region
        $region65: #{tpu_custom_call.1} parent=63 // pred_check
          %p395 = pneg %p163
        $region66: #{tpu_custom_call.1} parent=63 // pred_check_branch
          %397 = sbr.rel (%p395) target = $region68
        $region67: #{tpu_custom_call.1} parent=63 // pred_region
          %398 = dma.done [#allocation4], 256
        $region68: #{tpu_custom_call.1} parent=63 // pred_fallthru
          _
        // Predicated region
        $region69: #{tpu_custom_call.1} parent=63 // pred_check
          %p399 = pneg %p184
        $region70: #{tpu_custom_call.1} parent=63 // pred_check_branch
          %401 = sbr.rel (%p399) target = $region72
        $region71: #{tpu_custom_call.1} parent=63 // pred_region
          %402 = dma.done [#allocation7], 256
        $region72: #{tpu_custom_call.1} parent=63 // pred_fallthru
          _
        // Predicated region
        $region73: #{tpu_custom_call.1} parent=63 // pred_check
          %p403 = pneg %p205
        $region74: #{tpu_custom_call.1} parent=63 // pred_check_branch
          %405 = sbr.rel (%p403) target = $region76
        $region75: #{tpu_custom_call.1} parent=63 // pred_region
          %406 = dma.done [#allocation7], 256
        $region76: #{tpu_custom_call.1} parent=63 // pred_fallthru
          _
        %p407 = scmp.lt.s32.totalorder %s27, 1
        %s408 = scalar_select %p407, %s27, 1
        %s409 = smul.addr %s408, 8
        %s410 = scalar_lea.vmem %s0, %s409
        %p411 = pneg %p48
        %p412 = pneg %p45
        %p413 = scmp.lt.s32.totalorder %s27, 1
        %s414 = scalar_select %p413, %s27, 1
        %s415 = smul.addr %s414, 8
        %s416 = scalar_lea.vmem %s1, %s415
        %p417 = pneg %p74
        %p418 = pneg %p71
        %p419 = scmp.lt.s32.totalorder %s27, 1
        %s420 = scalar_select %p419, %s27, 1
        %s421 = smul.addr %s420, 8
        %s422 = scalar_lea.vmem %s2, %s421
        %p423 = pneg %p100
        %p424 = pneg %p97
        %p425 = pneg %p121
        %p426 = pneg %p118
        %p427 = pneg %p142
        %p428 = pneg %p139
        %p429 = pneg %p163
        %p430 = pneg %p160
        %p431 = pneg %p184
        %p432 = pneg %p181
        %p433 = pneg %p205
        %p434 = pneg %p202
        %p435 = pneg %p226
        %p436 = pneg %p223
        %p437 = pneg %p247
        %p438 = pneg %p244
        %p439 = pneg %p268
        %p440 = pneg %p265
        %p441 = pneg %p294
        %p442 = pneg %p291
        %s443 = sand.u32 %s281, 1
        %s444 = scalar_lea.sflag [#allocation5], %s443
        %s445 = sand.u32 %s281, 1
        %s446 = smul.addr %s445, 8
        %s447 = scalar_lea.vmem [#allocation9], %s446
        %p448 = scmp.lt.s32.totalorder %s27, 1
        %s449 = scalar_select %p448, %s27, 1
        %s450 = smul.addr %s449, 8
        %s451 = scalar_lea.vmem %s0, %s450
        %p452 = scmp.lt.s32.totalorder %s27, 1
        %s453 = scalar_select %p452, %s27, 1
        %s454 = smul.addr %s453, 8
        %s455 = scalar_lea.vmem %s1, %s454
        %p456 = scmp.lt.s32.totalorder %s27, 1
        %s457 = scalar_select %p456, %s27, 1
        %s458 = smul.addr %s457, 8
        %s459 = scalar_lea.vmem %s2, %s458
        %v461 = vld [vmem:[%s9] sm:$0xff]
        %v462 = vld [vmem:[%s9 + $0x8] sm:$0xff]
        %v463 = vld [vmem:[%s10] sm:$0x1]
        %v464 = vld [vmem:[%s451] sm:$0xff]
        %v465 = vpack.c.bf16 %v464, %v464
        %v466 = vld [vmem:[%s3] sm:$0xf]
        %v467 = vld [vmem:[%s3 + $0x4] sm:$0xf]
        %v468 = vld [vmem:[%s3 + $0x8] sm:$0xf]
        %v469 = vld [vmem:[%s3 + $0xc] sm:$0xf]
        %v470 = vlaneseq
        %v471 = vshrl.u32 %v470, 7
        %v472 = vsub.s32 0, %v471
        %v473 = vrot.slane %v461, %v472
        %v478 = vunpack.c.l.b16 %v466
        %v479 = vunpack.c.l.b16 %v467
        %v480 = vunpack.c.l.b16 %v468
        %v481 = vunpack.c.l.b16 %v469
        %v482 = vpack.c.b16 %v479, %v478
        %v483 = vpack.c.b16 %v481, %v480
        %vm486 = vcmask 261120
        %v488 = vsel %vm486, %v465, 0
        %490 = vmatprep.subr.bf16.mxu0 0
        %491 = vmatpush1.bf16.msra.mxu0 0
        %492 = vmatprep.subr.bf16.mxu0 0
        %493 = vmatpush1.bf16.msra.mxu0 0
        %494 = vmatprep.subr.bf16.mxu0 0
        %495 = vmatpush1.bf16.msra.mxu0 0
        %496 = vmatprep.subr.bf16.mxu0 0
        %497 = vmatpush1.bf16.msra.mxu0 0
        %498 = vmatprep.subr.bf16.mxu0 0
        %499 = vmatpush1.bf16.msra.mxu0 0
        %500 = vmatprep.subr.bf16.mxu0 0
        %501 = vmatpush1.bf16.msra.mxu0 0
        %502 = vmatprep.subr.bf16.mxu0 0
        %503 = vmatpush1.bf16.msra.mxu0 %v483
        %504 = vmatprep.subr.bf16.mxu0 0
        %505 = vmatpush1.bf16.msra.mxu0 %v482
        %506 = vmatprep.subr.bf16.mxu0 0
        %507 = vmatpush2.bf16.msra.mxu0 0
        %508 = vmatprep.subr.bf16.mxu0 0
        %509 = vmatpush2.bf16.msra.mxu0 0
        %510 = vmatprep.subr.bf16.mxu0 0
        %511 = vmatpush2.bf16.msra.mxu0 0
        %512 = vmatprep.subr.bf16.mxu0 0
        %513 = vmatpush2.bf16.msra.mxu0 0
        %514 = vmatprep.subr.bf16.mxu0 0
        %515 = vmatpush2.bf16.msra.mxu0 0
        %516 = vmatprep.subr.bf16.mxu0 0
        %517 = vmatpush2.bf16.msra.mxu0 0
        %518 = vmatprep.subr.bf16.mxu0 0
        %519 = vmatpush2.bf16.msra.mxu0 0
        %520 = vmatprep.subr.bf16.mxu0 0
        %521 = vmatpush2.bf16.msra.mxu0 0
        %522 = vmatprep.mubr.bf16.mxu0 0
        %523 = vmatmul.mubr.bf16.gmra.mxu0 %v488
        %v524 = vpop.f32.mrf.mxu0
        %v525 = vadd.f32 %v473, %v524
        %v526 = vpop.f32.mrf.mxu0
        %v527 = vpop.f32.mrf.mxu0
        %v528 = vpop.f32.mrf.mxu0
        %529 = vdwg.mxu0
        %v530 = vpack.c.bf16 %v525, %v525
        %v531 = vld [vmem:[%s455] sm:$0xff]
        %v532 = vpack.c.bf16 %v531, %v531
        %v533 = vld [vmem:[%s4] sm:$0xf]
        %v534 = vld [vmem:[%s4 + $0x4] sm:$0xf]
        %v535 = vld [vmem:[%s4 + $0x8] sm:$0xf]
        %v536 = vld [vmem:[%s4 + $0xc] sm:$0xf]
        %v537 = vlaneseq
        %v538 = vshrl.u32 %v537, 7
        %v539 = vsub.s32 1, %v538
        %v540 = vrot.slane %v461, %v539
        %v545 = vunpack.c.l.b16 %v533
        %v546 = vunpack.c.l.b16 %v534
        %v547 = vunpack.c.l.b16 %v535
        %v548 = vunpack.c.l.b16 %v536
        %v549 = vpack.c.b16 %v546, %v545
        %v550 = vpack.c.b16 %v548, %v547
        %v554 = vsel %vm486, %v532, 0
        %556 = vmatprep.subr.bf16.mxu0 0
        %557 = vmatpush1.bf16.msra.mxu0 0
        %558 = vmatprep.subr.bf16.mxu0 0
        %559 = vmatpush1.bf16.msra.mxu0 0
        %560 = vmatprep.subr.bf16.mxu0 0
        %561 = vmatpush1.bf16.msra.mxu0 0
        %562 = vmatprep.subr.bf16.mxu0 0
        %563 = vmatpush1.bf16.msra.mxu0 0
        %564 = vmatprep.subr.bf16.mxu0 0
        %565 = vmatpush1.bf16.msra.mxu0 0
        %566 = vmatprep.subr.bf16.mxu0 0
        %567 = vmatpush1.bf16.msra.mxu0 0
        %568 = vmatprep.subr.bf16.mxu0 0
        %569 = vmatpush1.bf16.msra.mxu0 %v550
        %570 = vmatprep.subr.bf16.mxu0 0
        %571 = vmatpush1.bf16.msra.mxu0 %v549
        %572 = vmatprep.subr.bf16.mxu0 0
        %573 = vmatpush2.bf16.msra.mxu0 0
        %574 = vmatprep.subr.bf16.mxu0 0
        %575 = vmatpush2.bf16.msra.mxu0 0
        %576 = vmatprep.subr.bf16.mxu0 0
        %577 = vmatpush2.bf16.msra.mxu0 0
        %578 = vmatprep.subr.bf16.mxu0 0
        %579 = vmatpush2.bf16.msra.mxu0 0
        %580 = vmatprep.subr.bf16.mxu0 0
        %581 = vmatpush2.bf16.msra.mxu0 0
        %582 = vmatprep.subr.bf16.mxu0 0
        %583 = vmatpush2.bf16.msra.mxu0 0
        %584 = vmatprep.subr.bf16.mxu0 0
        %585 = vmatpush2.bf16.msra.mxu0 0
        %586 = vmatprep.subr.bf16.mxu0 0
        %587 = vmatpush2.bf16.msra.mxu0 0
        %588 = vmatprep.mubr.bf16.mxu0 0
        %589 = vmatmul.mubr.bf16.gmra.mxu0 %v554
        %v590 = vpop.f32.mrf.mxu0
        %v591 = vadd.f32 %v540, %v590
        %v592 = vpop.f32.mrf.mxu0
        %v593 = vpop.f32.mrf.mxu0
        %v594 = vpop.f32.mrf.mxu0
        %595 = vdwg.mxu0
        %v596 = vpack.c.bf16 %v591, %v591
        %v597 = vld [vmem:[%s459] sm:$0xff]
        %v598 = vpack.c.bf16 %v597, %v597
        %v599 = vld [vmem:[#allocation3] sm:$0xf]
        %v600 = vld [vmem:[#allocation3 + $0x4] sm:$0xf]
        %v601 = vld [vmem:[#allocation3 + $0x8] sm:$0xf]
        %v602 = vld [vmem:[#allocation3 + $0xc] sm:$0xf]
        %v603 = vlaneseq
        %v604 = vshrl.u32 %v603, 7
        %v605 = vsub.s32 2, %v604
        %v606 = vrot.slane %v461, %v605
        %v611 = vunpack.c.l.b16 %v599
        %v612 = vunpack.c.l.b16 %v600
        %v613 = vunpack.c.l.b16 %v601
        %v614 = vunpack.c.l.b16 %v602
        %v615 = vpack.c.b16 %v612, %v611
        %v616 = vpack.c.b16 %v614, %v613
        %v620 = vsel %vm486, %v598, 0
        %622 = vmatprep.subr.bf16.mxu0 0
        %623 = vmatpush1.bf16.msra.mxu0 0
        %624 = vmatprep.subr.bf16.mxu0 0
        %625 = vmatpush1.bf16.msra.mxu0 0
        %626 = vmatprep.subr.bf16.mxu0 0
        %627 = vmatpush1.bf16.msra.mxu0 0
        %628 = vmatprep.subr.bf16.mxu0 0
        %629 = vmatpush1.bf16.msra.mxu0 0
        %630 = vmatprep.subr.bf16.mxu0 0
        %631 = vmatpush1.bf16.msra.mxu0 0
        %632 = vmatprep.subr.bf16.mxu0 0
        %633 = vmatpush1.bf16.msra.mxu0 0
        %634 = vmatprep.subr.bf16.mxu0 0
        %635 = vmatpush1.bf16.msra.mxu0 %v616
        %636 = vmatprep.subr.bf16.mxu0 0
        %637 = vmatpush1.bf16.msra.mxu0 %v615
        %638 = vmatprep.subr.bf16.mxu0 0
        %639 = vmatpush2.bf16.msra.mxu0 0
        %640 = vmatprep.subr.bf16.mxu0 0
        %641 = vmatpush2.bf16.msra.mxu0 0
        %642 = vmatprep.subr.bf16.mxu0 0
        %643 = vmatpush2.bf16.msra.mxu0 0
        %644 = vmatprep.subr.bf16.mxu0 0
        %645 = vmatpush2.bf16.msra.mxu0 0
        %646 = vmatprep.subr.bf16.mxu0 0
        %647 = vmatpush2.bf16.msra.mxu0 0
        %648 = vmatprep.subr.bf16.mxu0 0
        %649 = vmatpush2.bf16.msra.mxu0 0
        %650 = vmatprep.subr.bf16.mxu0 0
        %651 = vmatpush2.bf16.msra.mxu0 0
        %652 = vmatprep.subr.bf16.mxu0 0
        %653 = vmatpush2.bf16.msra.mxu0 0
        %654 = vmatprep.mubr.bf16.mxu0 0
        %655 = vmatmul.mubr.bf16.gmra.mxu0 %v620
        %v656 = vpop.f32.mrf.mxu0
        %v657 = vadd.f32 %v606, %v656
        %v658 = vpop.f32.mrf.mxu0
        %v659 = vpop.f32.mrf.mxu0
        %v660 = vpop.f32.mrf.mxu0
        %661 = vdwg.mxu0
        %v662 = vpack.c.bf16 %v657, %v657
        %vm663 = vcmask 64512
        %v665 = vsel %vm663, %v530, 0
        %v668 = vsel %vm663, %v596, 0
        %670 = vmatprep.subr.bf16.mxu0 0
        %671 = vmatpush1.bf16.xpose.msra.mxu0 0
        %672 = vmatprep.subr.bf16.mxu0 0
        %673 = vmatpush1.bf16.xpose.msra.mxu0 0
        %674 = vmatprep.subr.bf16.mxu0 0
        %675 = vmatpush1.bf16.xpose.msra.mxu0 0
        %676 = vmatprep.subr.bf16.mxu0 0
        %677 = vmatpush1.bf16.xpose.msra.mxu0 0
        %678 = vmatprep.subr.bf16.mxu0 0
        %679 = vmatpush1.bf16.xpose.msra.mxu0 0
        %680 = vmatprep.subr.bf16.mxu0 0
        %681 = vmatpush1.bf16.xpose.msra.mxu0 0
        %682 = vmatprep.subr.bf16.mxu0 0
        %683 = vmatpush1.bf16.xpose.msra.mxu0 0
        %684 = vmatprep.subr.bf16.mxu0 0
        %685 = vmatpush1.bf16.xpose.msra.mxu0 %v668
        %686 = vmatprep.subr.bf16.mxu0 0
        %687 = vmatpush2.bf16.xpose.msra.mxu0 0
        %688 = vmatprep.subr.bf16.mxu0 0
        %689 = vmatpush2.bf16.xpose.msra.mxu0 0
        %690 = vmatprep.subr.bf16.mxu0 0
        %691 = vmatpush2.bf16.xpose.msra.mxu0 0
        %692 = vmatprep.subr.bf16.mxu0 0
        %693 = vmatpush2.bf16.xpose.msra.mxu0 0
        %694 = vmatprep.subr.bf16.mxu0 0
        %695 = vmatpush2.bf16.xpose.msra.mxu0 0
        %696 = vmatprep.subr.bf16.mxu0 0
        %697 = vmatpush2.bf16.xpose.msra.mxu0 0
        %698 = vmatprep.subr.bf16.mxu0 0
        %699 = vmatpush2.bf16.xpose.msra.mxu0 0
        %700 = vmatprep.subr.bf16.mxu0 0
        %701 = vmatpush2.bf16.xpose.msra.mxu0 0
        %702 = vmatprep.mubr.bf16.mxu0 0
        %703 = vmatmul.mubr.bf16.gmra.mxu0 %v665
        %v704 = vpop.f32.mrf.mxu0
        %v705 = vadd.f32 0.0, %v704
        %v706 = vpop.f32.mrf.mxu0
        %v707 = vpop.f32.mrf.mxu0
        %v708 = vpop.f32.mrf.mxu0
        %709 = vdwg.mxu0
        %v710 = vsel %vm663, %v705, -inf
        %711 = vmax.xlane.f32.xlu0 %v710
        %v712 = vpop.xlane.xlu0 %711
        %v713 = vsub.f32 %v705, %v712
        %v714 = vmul.f32 %v713, 1.442695
        %v715 = vpow.pop %v714
        %v716 = vsel %vm663, %v715, 0.0
        %717 = vadd.xlane.f32.xlu0 %v716
        %v718 = vpop.xlane.xlu0 %717
        %v719 = vrcp.pop %v718
        %v720 = vpack.c.bf16 %v715, %v715
        %v722 = vsel %vm663, %v720, 0
        %vm724 = vcmask 1043456
        %v726 = vsel %vm724, %v662, 0
        %728 = vmatprep.subr.bf16.mxu0 0
        %729 = vmatpush1.bf16.msra.mxu0 0
        %730 = vmatprep.subr.bf16.mxu0 0
        %731 = vmatpush1.bf16.msra.mxu0 0
        %732 = vmatprep.subr.bf16.mxu0 0
        %733 = vmatpush1.bf16.msra.mxu0 0
        %734 = vmatprep.subr.bf16.mxu0 0
        %735 = vmatpush1.bf16.msra.mxu0 0
        %736 = vmatprep.subr.bf16.mxu0 0
        %737 = vmatpush1.bf16.msra.mxu0 0
        %738 = vmatprep.subr.bf16.mxu0 0
        %739 = vmatpush1.bf16.msra.mxu0 0
        %740 = vmatprep.subr.bf16.mxu0 0
        %741 = vmatpush1.bf16.msra.mxu0 0
        %742 = vmatprep.subr.bf16.mxu0 0
        %743 = vmatpush1.bf16.msra.mxu0 %v726
        %744 = vmatprep.subr.bf16.mxu0 0
        %745 = vmatpush2.bf16.msra.mxu0 0
        %746 = vmatprep.subr.bf16.mxu0 0
        %747 = vmatpush2.bf16.msra.mxu0 0
        %748 = vmatprep.subr.bf16.mxu0 0
        %749 = vmatpush2.bf16.msra.mxu0 0
        %750 = vmatprep.subr.bf16.mxu0 0
        %751 = vmatpush2.bf16.msra.mxu0 0
        %752 = vmatprep.subr.bf16.mxu0 0
        %753 = vmatpush2.bf16.msra.mxu0 0
        %754 = vmatprep.subr.bf16.mxu0 0
        %755 = vmatpush2.bf16.msra.mxu0 0
        %756 = vmatprep.subr.bf16.mxu0 0
        %757 = vmatpush2.bf16.msra.mxu0 0
        %758 = vmatprep.subr.bf16.mxu0 0
        %759 = vmatpush2.bf16.msra.mxu0 0
        %760 = vmatprep.mubr.bf16.mxu0 0
        %761 = vmatmul.mubr.bf16.gmra.mxu0 %v722
        %v762 = vpop.f32.mrf.mxu0
        %v763 = vadd.f32 0.0, %v762
        %v764 = vpop.f32.mrf.mxu0
        %v765 = vpop.f32.mrf.mxu0
        %v766 = vpop.f32.mrf.mxu0
        %767 = vdwg.mxu0
        %v768 = vmul.f32 %v763, %v719
        %v769 = vpack.c.bf16 %v768, %v768
        %vm770 = vcmask 60416
        %771 = vst.msk [vmem:[#allocation2] sm:$0xf] %vm770, %v769
        %773 = vrot.lane.b32.xlu0 %v530, 120
        %v774 = vpop.permute.xlu0 %773
        %776 = vrot.lane.b32.xlu0 %v596, 120
        %v777 = vpop.permute.xlu0 %776
        %v779 = vsel %vm663, %v774, 0
        %v782 = vsel %vm663, %v777, 0
        %784 = vmatprep.subr.bf16.mxu0 0
        %785 = vmatpush1.bf16.xpose.msra.mxu0 0
        %786 = vmatprep.subr.bf16.mxu0 0
        %787 = vmatpush1.bf16.xpose.msra.mxu0 0
        %788 = vmatprep.subr.bf16.mxu0 0
        %789 = vmatpush1.bf16.xpose.msra.mxu0 0
        %790 = vmatprep.subr.bf16.mxu0 0
        %791 = vmatpush1.bf16.xpose.msra.mxu0 0
        %792 = vmatprep.subr.bf16.mxu0 0
        %793 = vmatpush1.bf16.xpose.msra.mxu0 0
        %794 = vmatprep.subr.bf16.mxu0 0
        %795 = vmatpush1.bf16.xpose.msra.mxu0 0
        %796 = vmatprep.subr.bf16.mxu0 0
        %797 = vmatpush1.bf16.xpose.msra.mxu0 0
        %798 = vmatprep.subr.bf16.mxu0 0
        %799 = vmatpush1.bf16.xpose.msra.mxu0 %v782
        %800 = vmatprep.subr.bf16.mxu0 0
        %801 = vmatpush2.bf16.xpose.msra.mxu0 0
        %802 = vmatprep.subr.bf16.mxu0 0
        %803 = vmatpush2.bf16.xpose.msra.mxu0 0
        %804 = vmatprep.subr.bf16.mxu0 0
        %805 = vmatpush2.bf16.xpose.msra.mxu0 0
        %806 = vmatprep.subr.bf16.mxu0 0
        %807 = vmatpush2.bf16.xpose.msra.mxu0 0
        %808 = vmatprep.subr.bf16.mxu0 0
        %809 = vmatpush2.bf16.xpose.msra.mxu0 0
        %810 = vmatprep.subr.bf16.mxu0 0
        %811 = vmatpush2.bf16.xpose.msra.mxu0 0
        %812 = vmatprep.subr.bf16.mxu0 0
        %813 = vmatpush2.bf16.xpose.msra.mxu0 0
        %814 = vmatprep.subr.bf16.mxu0 0
        %815 = vmatpush2.bf16.xpose.msra.mxu0 0
        %816 = vmatprep.mubr.bf16.mxu0 0
        %817 = vmatmul.mubr.bf16.gmra.mxu0 %v779
        %v818 = vpop.f32.mrf.mxu0
        %v819 = vadd.f32 0.0, %v818
        %v820 = vpop.f32.mrf.mxu0
        %v821 = vpop.f32.mrf.mxu0
        %v822 = vpop.f32.mrf.mxu0
        %823 = vdwg.mxu0
        %v824 = vsel %vm663, %v819, -inf
        %825 = vmax.xlane.f32.xlu0 %v824
        %v826 = vpop.xlane.xlu0 %825
        %v827 = vsub.f32 %v819, %v826
        %v828 = vmul.f32 %v827, 1.442695
        %v829 = vpow.pop %v828
        %v830 = vsel %vm663, %v829, 0.0
        %831 = vadd.xlane.f32.xlu0 %v830
        %v832 = vpop.xlane.xlu0 %831
        %v833 = vrcp.pop %v832
        %v834 = vpack.c.bf16 %v829, %v829
        %836 = vrot.lane.b32.xlu0 %v662, 120
        %v837 = vpop.permute.xlu0 %836
        %v839 = vsel %vm663, %v834, 0
        %v842 = vsel %vm724, %v837, 0
        %844 = vmatprep.subr.bf16.mxu0 0
        %845 = vmatpush1.bf16.msra.mxu0 0
        %846 = vmatprep.subr.bf16.mxu0 0
        %847 = vmatpush1.bf16.msra.mxu0 0
        %848 = vmatprep.subr.bf16.mxu0 0
        %849 = vmatpush1.bf16.msra.mxu0 0
        %850 = vmatprep.subr.bf16.mxu0 0
        %851 = vmatpush1.bf16.msra.mxu0 0
        %852 = vmatprep.subr.bf16.mxu0 0
        %853 = vmatpush1.bf16.msra.mxu0 0
        %854 = vmatprep.subr.bf16.mxu0 0
        %855 = vmatpush1.bf16.msra.mxu0 0
        %856 = vmatprep.subr.bf16.mxu0 0
        %857 = vmatpush1.bf16.msra.mxu0 0
        %858 = vmatprep.subr.bf16.mxu0 0
        %859 = vmatpush1.bf16.msra.mxu0 %v842
        %860 = vmatprep.subr.bf16.mxu0 0
        %861 = vmatpush2.bf16.msra.mxu0 0
        %862 = vmatprep.subr.bf16.mxu0 0
        %863 = vmatpush2.bf16.msra.mxu0 0
        %864 = vmatprep.subr.bf16.mxu0 0
        %865 = vmatpush2.bf16.msra.mxu0 0
        %866 = vmatprep.subr.bf16.mxu0 0
        %867 = vmatpush2.bf16.msra.mxu0 0
        %868 = vmatprep.subr.bf16.mxu0 0
        %869 = vmatpush2.bf16.msra.mxu0 0
        %870 = vmatprep.subr.bf16.mxu0 0
        %871 = vmatpush2.bf16.msra.mxu0 0
        %872 = vmatprep.subr.bf16.mxu0 0
        %873 = vmatpush2.bf16.msra.mxu0 0
        %874 = vmatprep.subr.bf16.mxu0 0
        %875 = vmatpush2.bf16.msra.mxu0 0
        %876 = vmatprep.mubr.bf16.mxu0 0
        %877 = vmatmul.mubr.bf16.gmra.mxu0 %v839
        %v878 = vpop.f32.mrf.mxu0
        %v879 = vadd.f32 0.0, %v878
        %v880 = vpop.f32.mrf.mxu0
        %v881 = vpop.f32.mrf.mxu0
        %v882 = vpop.f32.mrf.mxu0
        %883 = vdwg.mxu0
        %v884 = vmul.f32 %v879, %v833
        %v885 = vpack.c.bf16 %v884, %v884
        %v887 = vunpack.c.l.b16 %v885
        %v888 = vpack.c.b16 %v887, %v887
        %889 = vrot.lane.b32.xlu0 %v888, 8
        %v890 = vpop.permute.xlu0 %889
        %vm892 = vcmask 126016
        %893 = vst.msk [vmem:[#allocation2] sm:$0xf] %vm892, %v890
        %894 = vrot.lane.b32.xlu0 %v530, 112
        %v895 = vpop.permute.xlu0 %894
        %896 = vrot.lane.b32.xlu0 %v596, 112
        %v897 = vpop.permute.xlu0 %896
        %v899 = vsel %vm663, %v895, 0
        %v902 = vsel %vm663, %v897, 0
        %904 = vmatprep.subr.bf16.mxu0 0
        %905 = vmatpush1.bf16.xpose.msra.mxu0 0
        %906 = vmatprep.subr.bf16.mxu0 0
        %907 = vmatpush1.bf16.xpose.msra.mxu0 0
        %908 = vmatprep.subr.bf16.mxu0 0
        %909 = vmatpush1.bf16.xpose.msra.mxu0 0
        %910 = vmatprep.subr.bf16.mxu0 0
        %911 = vmatpush1.bf16.xpose.msra.mxu0 0
        %912 = vmatprep.subr.bf16.mxu0 0
        %913 = vmatpush1.bf16.xpose.msra.mxu0 0
        %914 = vmatprep.subr.bf16.mxu0 0
        %915 = vmatpush1.bf16.xpose.msra.mxu0 0
        %916 = vmatprep.subr.bf16.mxu0 0
        %917 = vmatpush1.bf16.xpose.msra.mxu0 0
        %918 = vmatprep.subr.bf16.mxu0 0
        %919 = vmatpush1.bf16.xpose.msra.mxu0 %v902
        %920 = vmatprep.subr.bf16.mxu0 0
        %921 = vmatpush2.bf16.xpose.msra.mxu0 0
        %922 = vmatprep.subr.bf16.mxu0 0
        %923 = vmatpush2.bf16.xpose.msra.mxu0 0
        %924 = vmatprep.subr.bf16.mxu0 0
        %925 = vmatpush2.bf16.xpose.msra.mxu0 0
        %926 = vmatprep.subr.bf16.mxu0 0
        %927 = vmatpush2.bf16.xpose.msra.mxu0 0
        %928 = vmatprep.subr.bf16.mxu0 0
        %929 = vmatpush2.bf16.xpose.msra.mxu0 0
        %930 = vmatprep.subr.bf16.mxu0 0
        %931 = vmatpush2.bf16.xpose.msra.mxu0 0
        %932 = vmatprep.subr.bf16.mxu0 0
        %933 = vmatpush2.bf16.xpose.msra.mxu0 0
        %934 = vmatprep.subr.bf16.mxu0 0
        %935 = vmatpush2.bf16.xpose.msra.mxu0 0
        %936 = vmatprep.mubr.bf16.mxu0 0
        %937 = vmatmul.mubr.bf16.gmra.mxu0 %v899
        %v938 = vpop.f32.mrf.mxu0
        %v939 = vadd.f32 0.0, %v938
        %v940 = vpop.f32.mrf.mxu0
        %v941 = vpop.f32.mrf.mxu0
        %v942 = vpop.f32.mrf.mxu0
        %943 = vdwg.mxu0
        %v944 = vsel %vm663, %v939, -inf
        %945 = vmax.xlane.f32.xlu0 %v944
        %v946 = vpop.xlane.xlu0 %945
        %v947 = vsub.f32 %v939, %v946
        %v948 = vmul.f32 %v947, 1.442695
        %v949 = vpow.pop %v948
        %v950 = vsel %vm663, %v949, 0.0
        %951 = vadd.xlane.f32.xlu0 %v950
        %v952 = vpop.xlane.xlu0 %951
        %v953 = vrcp.pop %v952
        %v954 = vpack.c.bf16 %v949, %v949
        %955 = vrot.lane.b32.xlu0 %v662, 112
        %v956 = vpop.permute.xlu0 %955
        %v958 = vsel %vm663, %v954, 0
        %v961 = vsel %vm724, %v956, 0
        %963 = vmatprep.subr.bf16.mxu0 0
        %964 = vmatpush1.bf16.msra.mxu0 0
        %965 = vmatprep.subr.bf16.mxu0 0
        %966 = vmatpush1.bf16.msra.mxu0 0
        %967 = vmatprep.subr.bf16.mxu0 0
        %968 = vmatpush1.bf16.msra.mxu0 0
        %969 = vmatprep.subr.bf16.mxu0 0
        %970 = vmatpush1.bf16.msra.mxu0 0
        %971 = vmatprep.subr.bf16.mxu0 0
        %972 = vmatpush1.bf16.msra.mxu0 0
        %973 = vmatprep.subr.bf16.mxu0 0
        %974 = vmatpush1.bf16.msra.mxu0 0
        %975 = vmatprep.subr.bf16.mxu0 0
        %976 = vmatpush1.bf16.msra.mxu0 0
        %977 = vmatprep.subr.bf16.mxu0 0
        %978 = vmatpush1.bf16.msra.mxu0 %v961
        %979 = vmatprep.subr.bf16.mxu0 0
        %980 = vmatpush2.bf16.msra.mxu0 0
        %981 = vmatprep.subr.bf16.mxu0 0
        %982 = vmatpush2.bf16.msra.mxu0 0
        %983 = vmatprep.subr.bf16.mxu0 0
        %984 = vmatpush2.bf16.msra.mxu0 0
        %985 = vmatprep.subr.bf16.mxu0 0
        %986 = vmatpush2.bf16.msra.mxu0 0
        %987 = vmatprep.subr.bf16.mxu0 0
        %988 = vmatpush2.bf16.msra.mxu0 0
        %989 = vmatprep.subr.bf16.mxu0 0
        %990 = vmatpush2.bf16.msra.mxu0 0
        %991 = vmatprep.subr.bf16.mxu0 0
        %992 = vmatpush2.bf16.msra.mxu0 0
        %993 = vmatprep.subr.bf16.mxu0 0
        %994 = vmatpush2.bf16.msra.mxu0 0
        %995 = vmatprep.mubr.bf16.mxu0 0
        %996 = vmatmul.mubr.bf16.gmra.mxu0 %v958
        %v997 = vpop.f32.mrf.mxu0
        %v998 = vadd.f32 0.0, %v997
        %v999 = vpop.f32.mrf.mxu0
        %v1000 = vpop.f32.mrf.mxu0
        %v1001 = vpop.f32.mrf.mxu0
        %1002 = vdwg.mxu0
        %v1003 = vmul.f32 %v998, %v953
        %v1004 = vpack.c.bf16 %v1003, %v1003
        %v1006 = vunpack.c.l.b16 %v1004
        %v1007 = vpack.c.b16 %v1006, %v1006
        %1008 = vrot.lane.b32.xlu0 %v1007, 16
        %v1009 = vpop.permute.xlu0 %1008
        %vm1011 = vcmask 191616
        %1012 = vst.msk [vmem:[#allocation2] sm:$0xf] %vm1011, %v1009
        %1013 = vrot.lane.b32.xlu0 %v530, 104
        %v1014 = vpop.permute.xlu0 %1013
        %1015 = vrot.lane.b32.xlu0 %v596, 104
        %v1016 = vpop.permute.xlu0 %1015
        %v1018 = vsel %vm663, %v1014, 0
        %v1021 = vsel %vm663, %v1016, 0
        %1023 = vmatprep.subr.bf16.mxu0 0
        %1024 = vmatpush1.bf16.xpose.msra.mxu0 0
        %1025 = vmatprep.subr.bf16.mxu0 0
        %1026 = vmatpush1.bf16.xpose.msra.mxu0 0
        %1027 = vmatprep.subr.bf16.mxu0 0
        %1028 = vmatpush1.bf16.xpose.msra.mxu0 0
        %1029 = vmatprep.subr.bf16.mxu0 0
        %1030 = vmatpush1.bf16.xpose.msra.mxu0 0
        %1031 = vmatprep.subr.bf16.mxu0 0
        %1032 = vmatpush1.bf16.xpose.msra.mxu0 0
        %1033 = vmatprep.subr.bf16.mxu0 0
        %1034 = vmatpush1.bf16.xpose.msra.mxu0 0
        %1035 = vmatprep.subr.bf16.mxu0 0
        %1036 = vmatpush1.bf16.xpose.msra.mxu0 0
        %1037 = vmatprep.subr.bf16.mxu0 0
        %1038 = vmatpush1.bf16.xpose.msra.mxu0 %v1021
        %1039 = vmatprep.subr.bf16.mxu0 0
        %1040 = vmatpush2.bf16.xpose.msra.mxu0 0
        %1041 = vmatprep.subr.bf16.mxu0 0
        %1042 = vmatpush2.bf16.xpose.msra.mxu0 0
        %1043 = vmatprep.subr.bf16.mxu0 0
        %1044 = vmatpush2.bf16.xpose.msra.mxu0 0
        %1045 = vmatprep.subr.bf16.mxu0 0
        %1046 = vmatpush2.bf16.xpose.msra.mxu0 0
        %1047 = vmatprep.subr.bf16.mxu0 0
        %1048 = vmatpush2.bf16.xpose.msra.mxu0 0
        %1049 = vmatprep.subr.bf16.mxu0 0
        %1050 = vmatpush2.bf16.xpose.msra.mxu0 0
        %1051 = vmatprep.subr.bf16.mxu0 0
        %1052 = vmatpush2.bf16.xpose.msra.mxu0 0
        %1053 = vmatprep.subr.bf16.mxu0 0
        %1054 = vmatpush2.bf16.xpose.msra.mxu0 0
        %1055 = vmatprep.mubr.bf16.mxu0 0
        %1056 = vmatmul.mubr.bf16.gmra.mxu0 %v1018
        %v1057 = vpop.f32.mrf.mxu0
        %v1058 = vadd.f32 0.0, %v1057
        %v1059 = vpop.f32.mrf.mxu0
        %v1060 = vpop.f32.mrf.mxu0
        %v1061 = vpop.f32.mrf.mxu0
        %1062 = vdwg.mxu0
        %v1063 = vsel %vm663, %v1058, -inf
        %1064 = vmax.xlane.f32.xlu0 %v1063
        %v1065 = vpop.xlane.xlu0 %1064
        %v1066 = vsub.f32 %v1058, %v1065
        %v1067 = vmul.f32 %v1066, 1.442695
        %v1068 = vpow.pop %v1067
        %v1069 = vsel %vm663, %v1068, 0.0
        %1070 = vadd.xlane.f32.xlu0 %v1069
        %v1071 = vpop.xlane.xlu0 %1070
        %v1072 = vrcp.pop %v1071
        %v1073 = vpack.c.bf16 %v1068, %v1068
        %1074 = vrot.lane.b32.xlu0 %v662, 104
        %v1075 = vpop.permute.xlu0 %1074
        %v1077 = vsel %vm663, %v1073, 0
        %v1080 = vsel %vm724, %v1075, 0
        %1082 = vmatprep.subr.bf16.mxu0 0
        %1083 = vmatpush1.bf16.msra.mxu0 0
        %1084 = vmatprep.subr.bf16.mxu0 0
        %1085 = vmatpush1.bf16.msra.mxu0 0
        %1086 = vmatprep.subr.bf16.mxu0 0
        %1087 = vmatpush1.bf16.msra.mxu0 0
        %1088 = vmatprep.subr.bf16.mxu0 0
        %1089 = vmatpush1.bf16.msra.mxu0 0
        %1090 = vmatprep.subr.bf16.mxu0 0
        %1091 = vmatpush1.bf16.msra.mxu0 0
        %1092 = vmatprep.subr.bf16.mxu0 0
        %1093 = vmatpush1.bf16.msra.mxu0 0
        %1094 = vmatprep.subr.bf16.mxu0 0
        %1095 = vmatpush1.bf16.msra.mxu0 0
        %1096 = vmatprep.subr.bf16.mxu0 0
        %1097 = vmatpush1.bf16.msra.mxu0 %v1080
        %1098 = vmatprep.subr.bf16.mxu0 0
        %1099 = vmatpush2.bf16.msra.mxu0 0
        %1100 = vmatprep.subr.bf16.mxu0 0
        %1101 = vmatpush2.bf16.msra.mxu0 0
        %1102 = vmatprep.subr.bf16.mxu0 0
        %1103 = vmatpush2.bf16.msra.mxu0 0
        %1104 = vmatprep.subr.bf16.mxu0 0
        %1105 = vmatpush2.bf16.msra.mxu0 0
        %1106 = vmatprep.subr.bf16.mxu0 0
        %1107 = vmatpush2.bf16.msra.mxu0 0
        %1108 = vmatprep.subr.bf16.mxu0 0
        %1109 = vmatpush2.bf16.msra.mxu0 0
        %1110 = vmatprep.subr.bf16.mxu0 0
        %1111 = vmatpush2.bf16.msra.mxu0 0
        %1112 = vmatprep.subr.bf16.mxu0 0
        %1113 = vmatpush2.bf16.msra.mxu0 0
        %1114 = vmatprep.mubr.bf16.mxu0 0
        %1115 = vmatmul.mubr.bf16.gmra.mxu0 %v1077
        %v1116 = vpop.f32.mrf.mxu0
        %v1117 = vadd.f32 0.0, %v1116
        %v1118 = vpop.f32.mrf.mxu0
        %v1119 = vpop.f32.mrf.mxu0
        %v1120 = vpop.f32.mrf.mxu0
        %1121 = vdwg.mxu0
        %v1122 = vmul.f32 %v1117, %v1072
        %v1123 = vpack.c.bf16 %v1122, %v1122
        %v1125 = vunpack.c.l.b16 %v1123
        %v1126 = vpack.c.b16 %v1125, %v1125
        %1127 = vrot.lane.b32.xlu0 %v1126, 24
        %v1128 = vpop.permute.xlu0 %1127
        %vm1130 = vcmask 257216
        %1131 = vst.msk [vmem:[#allocation2] sm:$0xf] %vm1130, %v1128
        %v1132 = vld [vmem:[#allocation2] sm:$0xf]
        %v1133 = vld [vmem:[#allocation6] sm:$0xf]
        %v1134 = vld [vmem:[#allocation6 + $0x4] sm:$0xf]
        %v1135 = vld [vmem:[#allocation6 + $0x8] sm:$0xf]
        %v1136 = vld [vmem:[#allocation6 + $0xc] sm:$0xf]
        %v1137 = vlaneseq
        %v1138 = vshrl.u32 %v1137, 7
        %v1139 = vsub.s32 3, %v1138
        %v1140 = vrot.slane %v461, %v1139
        %v1145 = vunpack.c.l.b16 %v1133
        %v1146 = vunpack.c.l.b16 %v1134
        %v1147 = vunpack.c.l.b16 %v1135
        %v1148 = vunpack.c.l.b16 %v1136
        %v1149 = vpack.c.b16 %v1146, %v1145
        %v1150 = vpack.c.b16 %v1148, %v1147
        %v1154 = vsel %vm486, %v1132, 0
        %1156 = vmatprep.subr.bf16.mxu0 0
        %1157 = vmatpush1.bf16.msra.mxu0 0
        %1158 = vmatprep.subr.bf16.mxu0 0
        %1159 = vmatpush1.bf16.msra.mxu0 0
        %1160 = vmatprep.subr.bf16.mxu0 0
        %1161 = vmatpush1.bf16.msra.mxu0 0
        %1162 = vmatprep.subr.bf16.mxu0 0
        %1163 = vmatpush1.bf16.msra.mxu0 0
        %1164 = vmatprep.subr.bf16.mxu0 0
        %1165 = vmatpush1.bf16.msra.mxu0 0
        %1166 = vmatprep.subr.bf16.mxu0 0
        %1167 = vmatpush1.bf16.msra.mxu0 0
        %1168 = vmatprep.subr.bf16.mxu0 0
        %1169 = vmatpush1.bf16.msra.mxu0 %v1150
        %1170 = vmatprep.subr.bf16.mxu0 0
        %1171 = vmatpush1.bf16.msra.mxu0 %v1149
        %1172 = vmatprep.subr.bf16.mxu0 0
        %1173 = vmatpush2.bf16.msra.mxu0 0
        %1174 = vmatprep.subr.bf16.mxu0 0
        %1175 = vmatpush2.bf16.msra.mxu0 0
        %1176 = vmatprep.subr.bf16.mxu0 0
        %1177 = vmatpush2.bf16.msra.mxu0 0
        %1178 = vmatprep.subr.bf16.mxu0 0
        %1179 = vmatpush2.bf16.msra.mxu0 0
        %1180 = vmatprep.subr.bf16.mxu0 0
        %1181 = vmatpush2.bf16.msra.mxu0 0
        %1182 = vmatprep.subr.bf16.mxu0 0
        %1183 = vmatpush2.bf16.msra.mxu0 0
        %1184 = vmatprep.subr.bf16.mxu0 0
        %1185 = vmatpush2.bf16.msra.mxu0 0
        %1186 = vmatprep.subr.bf16.mxu0 0
        %1187 = vmatpush2.bf16.msra.mxu0 0
        %1188 = vmatprep.mubr.bf16.mxu0 0
        %1189 = vmatmul.mubr.bf16.gmra.mxu0 %v1154
        %v1190 = vpop.f32.mrf.mxu0
        %v1191 = vadd.f32 %v1140, %v1190
        %v1192 = vpop.f32.mrf.mxu0
        %v1193 = vpop.f32.mrf.mxu0
        %v1194 = vpop.f32.mrf.mxu0
        %1195 = vdwg.mxu0
        %v1196 = vmul.f32 %v464, 2.0
        %v1197 = vadd.f32 %v1196, %v1191
        %v1198 = vsel %vm486, %v1197, 0.0
        %1199 = vadd.xlane.f32.xlu0 %v1198
        %v1200 = vpop.xlane.xlu0 %1199
        %v1201 = vrcp.pop 32.0
        %v1202 = vmul.f32 %v1200, %v1201
        %v1203 = vsub.f32 %v1197, %v1202
        %v1204 = vmul.f32 %v1203, %v1203
        %v1205 = vsel %vm486, %v1204, 0.0
        %1206 = vadd.xlane.f32.xlu0 %v1205
        %v1207 = vpop.xlane.xlu0 %1206
        %v1208 = vmul.f32 %v1207, %v1201
        %v1209 = vadd.f32 %v1208, 1e-05
        %v1210 = vrsqrt.pop %v1209
        %v1211 = vmul.f32 %v1203, %v1210
        %v1212 = vlaneseq
        %v1213 = vshrl.u32 %v1212, 7
        %v1214 = vsub.s32 4, %v1213
        %v1215 = vrot.slane %v461, %v1214
        %v1216 = vmul.f32 %v1211, %v1215
        %v1217 = vlaneseq
        %v1218 = vshrl.u32 %v1217, 7
        %v1219 = vsub.s32 5, %v1218
        %v1220 = vrot.slane %v461, %v1219
        %v1221 = vadd.f32 %v1216, %v1220
        %v1222 = vpack.c.bf16 %v1221, %v1221
        %v1223 = vld [vmem:[#allocation8] sm:$0xf]
        %v1224 = vld [vmem:[#allocation8 + $0x4] sm:$0xf]
        %v1225 = vld [vmem:[#allocation8 + $0x8] sm:$0xf]
        %v1226 = vld [vmem:[#allocation8 + $0xc] sm:$0xf]
        %v1228 = vlaneseq
        %v1229 = vshrl.u32 %v1228, 7
        %v1230 = vsub.s32 0, %v1229
        %v1231 = vrot.slane %v463, %v1230
        %v1237 = vunpack.c.l.b16 %v1223
        %v1238 = vunpack.c.l.b16 %v1224
        %v1239 = vunpack.c.l.b16 %v1225
        %v1240 = vunpack.c.l.b16 %v1226
        %v1241 = vpack.c.b16 %v1238, %v1237
        %v1242 = vpack.c.b16 %v1240, %v1239
        %v1246 = vsel %vm486, %v1222, 0
        %1248 = vmatprep.subr.bf16.mxu0 0
        %1249 = vmatpush1.bf16.msra.mxu0 0
        %1250 = vmatprep.subr.bf16.mxu0 0
        %1251 = vmatpush1.bf16.msra.mxu0 0
        %1252 = vmatprep.subr.bf16.mxu0 0
        %1253 = vmatpush1.bf16.msra.mxu0 0
        %1254 = vmatprep.subr.bf16.mxu0 0
        %1255 = vmatpush1.bf16.msra.mxu0 0
        %1256 = vmatprep.subr.bf16.mxu0 0
        %1257 = vmatpush1.bf16.msra.mxu0 0
        %1258 = vmatprep.subr.bf16.mxu0 0
        %1259 = vmatpush1.bf16.msra.mxu0 0
        %1260 = vmatprep.subr.bf16.mxu0 0
        %1261 = vmatpush1.bf16.msra.mxu0 %v1242
        %1262 = vmatprep.subr.bf16.mxu0 0
        %1263 = vmatpush1.bf16.msra.mxu0 %v1241
        %1264 = vmatprep.subr.bf16.mxu0 0
        %1265 = vmatpush2.bf16.msra.mxu0 0
        %1266 = vmatprep.subr.bf16.mxu0 0
        %1267 = vmatpush2.bf16.msra.mxu0 0
        %1268 = vmatprep.subr.bf16.mxu0 0
        %1269 = vmatpush2.bf16.msra.mxu0 0
        %1270 = vmatprep.subr.bf16.mxu0 0
        %1271 = vmatpush2.bf16.msra.mxu0 0
        %1272 = vmatprep.subr.bf16.mxu0 0
        %1273 = vmatpush2.bf16.msra.mxu0 0
        %1274 = vmatprep.subr.bf16.mxu0 0
        %1275 = vmatpush2.bf16.msra.mxu0 0
        %1276 = vmatprep.subr.bf16.mxu0 0
        %1277 = vmatpush2.bf16.msra.mxu0 0
        %1278 = vmatprep.subr.bf16.mxu0 0
        %1279 = vmatpush2.bf16.msra.mxu0 0
        %1280 = vmatprep.mubr.bf16.mxu0 0
        %1281 = vmatmul.mubr.bf16.gmra.mxu0 %v1246
        %v1282 = vpop.f32.mrf.mxu0
        %v1283 = vadd.f32 %v1231, %v1282
        %v1284 = vpop.f32.mrf.mxu0
        %v1285 = vpop.f32.mrf.mxu0
        %v1286 = vpop.f32.mrf.mxu0
        %1287 = vdwg.mxu0
        %v1288 = vmax.f32 %v1283, 0.0
        %v1289 = vpack.c.bf16 %v1288, %v1288
        %v1290 = vld [vmem:[%s8] sm:$0xf]
        %v1291 = vld [vmem:[%s8 + $0x4] sm:$0xf]
        %v1292 = vld [vmem:[%s8 + $0x8] sm:$0xf]
        %v1293 = vld [vmem:[%s8 + $0xc] sm:$0xf]
        %v1294 = vld [vmem:[%s8 + $0x10] sm:$0xf]
        %v1295 = vld [vmem:[%s8 + $0x14] sm:$0xf]
        %v1296 = vld [vmem:[%s8 + $0x18] sm:$0xf]
        %v1297 = vld [vmem:[%s8 + $0x1c] sm:$0xf]
        %v1298 = vld [vmem:[%s8 + $0x20] sm:$0xf]
        %v1299 = vld [vmem:[%s8 + $0x24] sm:$0xf]
        %v1300 = vld [vmem:[%s8 + $0x28] sm:$0xf]
        %v1301 = vld [vmem:[%s8 + $0x2c] sm:$0xf]
        %v1302 = vld [vmem:[%s8 + $0x30] sm:$0xf]
        %v1303 = vld [vmem:[%s8 + $0x34] sm:$0xf]
        %v1304 = vld [vmem:[%s8 + $0x38] sm:$0xf]
        %v1305 = vld [vmem:[%s8 + $0x3c] sm:$0xf]
        %v1306 = vlaneseq
        %v1307 = vshrl.u32 %v1306, 7
        %v1308 = vsub.s32 6, %v1307
        %v1309 = vrot.slane %v461, %v1308
        %v1326 = vunpack.c.l.b16 %v1290
        %v1327 = vunpack.c.l.b16 %v1291
        %v1328 = vunpack.c.l.b16 %v1292
        %v1329 = vunpack.c.l.b16 %v1293
        %v1330 = vunpack.c.l.b16 %v1294
        %v1331 = vunpack.c.l.b16 %v1295
        %v1332 = vunpack.c.l.b16 %v1296
        %v1333 = vunpack.c.l.b16 %v1297
        %v1334 = vunpack.c.l.b16 %v1298
        %v1335 = vunpack.c.l.b16 %v1299
        %v1336 = vunpack.c.l.b16 %v1300
        %v1337 = vunpack.c.l.b16 %v1301
        %v1338 = vunpack.c.l.b16 %v1302
        %v1339 = vunpack.c.l.b16 %v1303
        %v1340 = vunpack.c.l.b16 %v1304
        %v1341 = vunpack.c.l.b16 %v1305
        %v1342 = vpack.c.b16 %v1327, %v1326
        %v1343 = vpack.c.b16 %v1329, %v1328
        %v1344 = vpack.c.b16 %v1331, %v1330
        %v1345 = vpack.c.b16 %v1333, %v1332
        %v1346 = vpack.c.b16 %v1335, %v1334
        %v1347 = vpack.c.b16 %v1337, %v1336
        %v1348 = vpack.c.b16 %v1339, %v1338
        %v1349 = vpack.c.b16 %v1341, %v1340
        %1358 = vmatprep.subr.bf16.mxu0 0
        %1359 = vmatpush1.bf16.msra.mxu0 %v1349
        %1360 = vmatprep.subr.bf16.mxu0 0
        %1361 = vmatpush1.bf16.msra.mxu0 %v1348
        %1362 = vmatprep.subr.bf16.mxu0 0
        %1363 = vmatpush1.bf16.msra.mxu0 %v1347
        %1364 = vmatprep.subr.bf16.mxu0 0
        %1365 = vmatpush1.bf16.msra.mxu0 %v1346
        %1366 = vmatprep.subr.bf16.mxu0 0
        %1367 = vmatpush1.bf16.msra.mxu0 %v1345
        %1368 = vmatprep.subr.bf16.mxu0 0
        %1369 = vmatpush1.bf16.msra.mxu0 %v1344
        %1370 = vmatprep.subr.bf16.mxu0 0
        %1371 = vmatpush1.bf16.msra.mxu0 %v1343
        %1372 = vmatprep.subr.bf16.mxu0 0
        %1373 = vmatpush1.bf16.msra.mxu0 %v1342
        %1374 = vmatprep.subr.bf16.mxu0 0
        %1375 = vmatpush2.bf16.msra.mxu0 0
        %1376 = vmatprep.subr.bf16.mxu0 0
        %1377 = vmatpush2.bf16.msra.mxu0 0
        %1378 = vmatprep.subr.bf16.mxu0 0
        %1379 = vmatpush2.bf16.msra.mxu0 0
        %1380 = vmatprep.subr.bf16.mxu0 0
        %1381 = vmatpush2.bf16.msra.mxu0 0
        %1382 = vmatprep.subr.bf16.mxu0 0
        %1383 = vmatpush2.bf16.msra.mxu0 0
        %1384 = vmatprep.subr.bf16.mxu0 0
        %1385 = vmatpush2.bf16.msra.mxu0 0
        %1386 = vmatprep.subr.bf16.mxu0 0
        %1387 = vmatpush2.bf16.msra.mxu0 0
        %1388 = vmatprep.subr.bf16.mxu0 0
        %1389 = vmatpush2.bf16.msra.mxu0 0
        %1390 = vmatprep.mubr.bf16.mxu0 0
        %1391 = vmatmul.mubr.bf16.gmra.mxu0 %v1289
        %v1392 = vpop.f32.mrf.mxu0
        %v1393 = vadd.f32 %v1309, %v1392
        %v1394 = vpop.f32.mrf.mxu0
        %v1395 = vpop.f32.mrf.mxu0
        %v1396 = vpop.f32.mrf.mxu0
        %1397 = vdwg.mxu0
        %v1398 = vmul.f32 %v1221, 2.0
        %v1399 = vadd.f32 %v1398, %v1393
        %v1400 = vsel %vm486, %v1399, 0.0
        %1401 = vadd.xlane.f32.xlu0 %v1400
        %v1402 = vpop.xlane.xlu0 %1401
        %v1403 = vmul.f32 %v1402, %v1201
        %v1404 = vsub.f32 %v1399, %v1403
        %v1405 = vmul.f32 %v1404, %v1404
        %v1406 = vsel %vm486, %v1405, 0.0
        %1407 = vadd.xlane.f32.xlu0 %v1406
        %v1408 = vpop.xlane.xlu0 %1407
        %v1409 = vmul.f32 %v1408, %v1201
        %v1410 = vadd.f32 %v1409, 1e-05
        %v1411 = vrsqrt.pop %v1410
        %v1412 = vmul.f32 %v1404, %v1411
        %v1413 = vlaneseq
        %v1414 = vshrl.u32 %v1413, 7
        %v1415 = vsub.s32 7, %v1414
        %v1416 = vrot.slane %v461, %v1415
        %v1417 = vmul.f32 %v1412, %v1416
        %v1418 = vlaneseq
        %v1419 = vshrl.u32 %v1418, 7
        %v1420 = vsub.s32 0, %v1419
        %v1421 = vrot.slane %v462, %v1420
        %v1422 = vadd.f32 %v1417, %v1421
        %1423 = vst.msk [vmem:[%s447] sm:$0xff] %vm486, %v1422
        %s1424 = sand.u32 %s281, 1
        %s1425 = scalar_lea.sflag [#allocation5], %s1424
        %s1426 = sand.u32 %s281, 1
        %s1427 = smul.addr %s1426, 8
        %s1428 = scalar_lea.vmem [#allocation9], %s1427
        // Predicated region
        $region77: #{tpu_custom_call.1} parent=63 // pred_check
          %p1429 = pneg %p291
        $region78: #{tpu_custom_call.1} parent=63 // pred_check_branch
          %1431 = sbr.rel (%p1429) target = $region80
        $region79: #{tpu_custom_call.1} parent=63 // pred_region
          %s1433 = ssub.s32 128, 128
          %1434 = vsyncadd %s1425, %s1433
          %s1435 = smul.addr %s27, 128
          %s1436 = scalar_lea.hbm %s11, %s1435
          %s1438 = sshll.u32 %s1428, 4
          %s1439 = int_to_ptr.vmem [resolvable:$true] %s1438
          %1441 = dma.vmem_to_hbm [thread:$0]  %s1439, 128, %s1436, %s1425
        $region80: #{tpu_custom_call.1} parent=63 // pred_fallthru
          _
      $region64: #{tpu_custom_call.1} parent=5 // pred_fallthru
        _
      %p1442 = scmp.le.s32.totalorder 2, %s22
      // Predicated region
      $region81: #{tpu_custom_call.1} parent=5 // pred_check
        %p1443 = pneg %p1442
      $region82: #{tpu_custom_call.1} parent=5 // pred_check_branch
        %1445 = sbr.rel (%p1443) target = $region84
      $region83: #{tpu_custom_call.1} parent=5 // pred_region
        %s1446 = ssub.s32 %s22, 2
        // Predicated region
        $region85: #{tpu_custom_call.1} parent=83 // pred_check
          %p1447 = pneg %p297
        $region86: #{tpu_custom_call.1} parent=83 // pred_check_branch
          %1449 = sbr.rel (%p1447) target = $region88
        $region87: #{tpu_custom_call.1} parent=83 // pred_region
          %s1450 = sand.u32 %s282, 1
          %s1451 = scalar_lea.sflag [#allocation5], %s1450
          %s1452 = sand.u32 %s282, 1
          %s1453 = smul.addr %s1452, 8
          %s1454 = scalar_lea.vmem [#allocation9], %s1453
          %1455 = dma.done %s1451, 128
        $region88: #{tpu_custom_call.1} parent=83 // pred_fallthru
          _
      $region84: #{tpu_custom_call.1} parent=5 // pred_fallthru
        _
    $region6: #{tpu_custom_call.1} parent=1 // loop_footer
      %s26 = sadd.s32 1, %s22
    $region7: #{tpu_custom_call.1} parent=1 // loop_footer_branch
      %21 = sbr.rel target = $region3
    $region8: #{tpu_custom_call.1} parent=1 // loop_exit
      _
    %1456 = vsyncpa [#allocation4], 1
    %s1457 = scalar_lea.sflag [#allocation4], 1
    %1458 = vsyncpa %s1457, 1
    %1459 = vsyncpa [#allocation7], 1
    %1460 = vsyncpa [#allocation5], 1
    %s1461 = scalar_lea.sflag [#allocation5], 1
    %1462 = vsyncpa %s1461, 1

</llo_original>
